<compile_context>
chip_gen: v6e
topology: v6e:2x2x1
jax: 0.10.0
libtpu: 0.0.40
codegen_flags: <defaults>
</compile_context>

<pallas_src>
import functools

import jax
import jax.numpy as jnp
from jax.experimental import pallas as pl
from jax.experimental.pallas import tpu as pltpu

D_IN = 512
D_H = 512
N_CLASSES = 10
C_PAD = 128  # lane-dense padded width of the final layer


def _mlp_kernel(h_ref, w1_ref, b1_ref, w2_ref, b2_ref, w3_ref, b3_ref, out_ref):
    # bf16 operands on the MXU, f32 accumulation throughout.
    x = h_ref[...].astype(jnp.bfloat16)

    # Linear(512, 512) + ReLU
    z1 = jnp.dot(x, w1_ref[...], preferred_element_type=jnp.float32) + b1_ref[...]
    a1 = jnp.maximum(z1, 0.0).astype(jnp.bfloat16)

    # Linear(512, 512) + ReLU
    z2 = jnp.dot(a1, w2_ref[...], preferred_element_type=jnp.float32) + b2_ref[...]
    a2 = jnp.maximum(z2, 0.0).astype(jnp.bfloat16)

    # Linear(512, 10) -- computed as 512x128 (zero-padded) for lane-dense stores.
    z3 = jnp.dot(a2, w3_ref[...], preferred_element_type=jnp.float32) + b3_ref[...]
    out_ref[...] = z3.astype(out_ref.dtype)


def _round_up(x, m):
    return (x + m - 1) // m * m


def label_predictor_forward(h, kparams, *, tile_m=256):
    """h: (B, 512) float32. kparams: kernel-layout params (see prepare_kernel_params)."""
    B, D = h.shape
    assert D == D_IN

    w1, b1 = kparams["w1"], kparams["b1"]  # (512, 512) bf16, (1, 512) f32
    w2, b2 = kparams["w2"], kparams["b2"]  # (512, 512) bf16, (1, 512) f32
    w3, b3 = kparams["w3"], kparams["b3"]  # (512, 128) bf16, (1, 128) f32 (zero-padded)

    # Tile selection: fill the MXU when the batch allows; otherwise process the
    # whole (sublane-padded) batch in a single grid step.
    tm = min(tile_m, _round_up(B, 8))
    Bp = _round_up(B, tm)
    if Bp != B:
        h = jnp.pad(h, ((0, Bp - B), (0, 0)))

    grid = (Bp // tm,)
    const = lambda shape: pl.BlockSpec(shape, lambda i: (0, 0))  # VMEM-resident params

    out_padded = pl.pallas_call(
        _mlp_kernel,
        out_shape=jax.ShapeDtypeStruct((Bp, C_PAD), jnp.float32),
        grid_spec=pltpu.PrefetchScalarGridSpec(
            num_scalar_prefetch=0,
            grid=grid,
            in_specs=[
                pl.BlockSpec((tm, D_IN), lambda i: (i, 0)),  # streamed h tile
                const((D_IN, D_H)), const((1, D_H)),         # layer 1
                const((D_H, D_H)), const((1, D_H)),          # layer 2
                const((D_H, C_PAD)), const((1, C_PAD)),      # layer 3 (padded)
            ],
            out_specs=pl.BlockSpec((tm, C_PAD), lambda i: (i, 0)),
        ),
        compiler_params=pltpu.CompilerParams(
            dimension_semantics=("parallel",),  # batch tiles shard across TCs on v7x
            vmem_limit_bytes=32 * 1024 * 1024,
        ),
    )(h, w1, b1, w2, b2, w3, b3)

    return out_padded[:B, :N_CLASSES]


def init_params(key):
    """Deterministic init mimicking torch.nn.Linear default (uniform(+-1/sqrt(in)))."""
    dims = [(512, 512), (512, 512), (512, 10)]  # (in_features, out_features)
    params = {}
    for idx, (fan_in, fan_out) in enumerate(dims, start=1):
        key, kw, kb = jax.random.split(key, 3)
        bound = 1.0 / jnp.sqrt(jnp.float32(fan_in))
        # stored already transposed to (in, out) so the hot path is x @ W + b
        params[f"w{idx}"] = jax.random.uniform(
            kw, (fan_in, fan_out), jnp.float32, -bound, bound
        )
        params[f"b{idx}"] = jax.random.uniform(
            kb, (1, fan_out), jnp.float32, -bound, bound
        )
    return params


def prepare_kernel_params(params):
    """Cast weights to bf16 and zero-pad the final layer to 128 output lanes."""
    kp = {}
    for idx in (1, 2, 3):
        w = params[f"w{idx}"]
        b = params[f"b{idx}"]
        if idx == 3:
            w = jnp.pad(w, ((0, 0), (0, C_PAD - w.shape[1])))
            b = jnp.pad(b, ((0, 0), (0, C_PAD - b.shape[1])))
        kp[f"w{idx}"] = w.astype(jnp.bfloat16)
        kp[f"b{idx}"] = b.astype(jnp.float32)
    return kp


def _reference_bf16(h, kparams):
    """Pure-JAX reference with the same bf16-operand / f32-accumulate math."""
    x = h.astype(jnp.bfloat16)
    z1 = jnp.dot(x, kparams["w1"], preferred_element_type=jnp.float32) + kparams["b1"]
    a1 = jnp.maximum(z1, 0.0).astype(jnp.bfloat16)
    z2 = jnp.dot(a1, kparams["w2"], preferred_element_type=jnp.float32) + kparams["b2"]
    a2 = jnp.maximum(z2, 0.0).astype(jnp.bfloat16)
    z3 = jnp.dot(a2, kparams["w3"], preferred_element_type=jnp.float32) + kparams["b3"]
    return z3[:, :N_CLASSES]


def _reference_f32(h, params):
    a1 = jnp.maximum(h @ params["w1"] + params["b1"], 0.0)
    a2 = jnp.maximum(a1 @ params["w2"] + params["b2"], 0.0)
    return a2 @ params["w3"] + params["b3"]


if __name__ == "__main__":
    key = jax.random.PRNGKey(0)
    kx, kp = jax.random.split(key)

    B = 32
    h = jax.random.normal(kx, (B, D_IN), jnp.float32)
    params = init_params(kp)
    kparams = prepare_kernel_params(params)

    fwd = jax.jit(functools.partial(label_predictor_forward, tile_m=256))
    out = fwd(h, kparams)
    jax.block_until_ready(out)

    assert out.shape == (B, N_CLASSES), out.shape

    # Exact-math check against a pure-JAX bf16/f32-accum reference.
    ref_bf16 = _reference_bf16(h, kparams)
    assert jnp.allclose(out, ref_bf16, atol=2e-3, rtol=2e-3), "mismatch vs bf16 reference"

    # Looser sanity check against the full-f32 module semantics.
    ref_f32 = _reference_f32(h, params)
    assert jnp.allclose(out, ref_f32, atol=1e-1, rtol=1e-1), "mismatch vs f32 reference"

    print("KERNEL_OK")
</pallas_src>

<mosaic_0001>
module attributes {stable_mosaic.version = 11 : i64} {
  func.func @_mlp_kernel(%arg0: i32, %arg1: memref<32x512xf32, #tpu.memory_space<vmem>>, %arg2: memref<512x512xbf16, #tpu.memory_space<vmem>>, %arg3: memref<1x512xf32, #tpu.memory_space<vmem>>, %arg4: memref<512x512xbf16, #tpu.memory_space<vmem>>, %arg5: memref<1x512xf32, #tpu.memory_space<vmem>>, %arg6: memref<512x128xbf16, #tpu.memory_space<vmem>>, %arg7: memref<1x128xf32, #tpu.memory_space<vmem>>, %arg8: memref<32x128xf32, #tpu.memory_space<vmem>>) attributes {dimension_semantics = [#tpu.dimension_semantics<parallel>], iteration_bounds = array<i64: 1>, scalar_prefetch = 0 : i64, scratch_operands = 0 : i64, tpu.core_type = #tpu.core_type<tc>, window_params = [{transform_indices = @transform_0, window_bounds = array<i64: 32, 512>}, {pipeline_mode = #tpu.pipeline_mode<synchronous>, transform_indices = @transform_1, window_bounds = array<i64: 512, 512>}, {pipeline_mode = #tpu.pipeline_mode<synchronous>, transform_indices = @transform_2, window_bounds = array<i64: 1, 512>}, {pipeline_mode = #tpu.pipeline_mode<synchronous>, transform_indices = @transform_3, window_bounds = array<i64: 512, 512>}, {pipeline_mode = #tpu.pipeline_mode<synchronous>, transform_indices = @transform_4, window_bounds = array<i64: 1, 512>}, {pipeline_mode = #tpu.pipeline_mode<synchronous>, transform_indices = @transform_5, window_bounds = array<i64: 512, 128>}, {pipeline_mode = #tpu.pipeline_mode<synchronous>, transform_indices = @transform_6, window_bounds = array<i64: 1, 128>}, {transform_indices = @transform_7, window_bounds = array<i64: 32, 128>}]} {
    %c0 = arith.constant 0 : index
    %c0_0 = arith.constant 0 : index
    %0 = vector.load %arg1[%c0, %c0_0] : memref<32x512xf32, #tpu.memory_space<vmem>>, vector<32x512xf32>
    %1 = arith.truncf %0 : vector<32x512xf32> to vector<32x512xbf16>
    %c0_1 = arith.constant 0 : index
    %c0_2 = arith.constant 0 : index
    %2 = vector.load %arg2[%c0_1, %c0_2] : memref<512x512xbf16, #tpu.memory_space<vmem>>, vector<512x512xbf16>
    %cst = arith.constant dense<0.000000e+00> : vector<32x512xf32>
    %3 = tpu.matmul %1, %2, %cst {dimension_numbers = #tpu.dot_dimension_numbers<[1], [0], [0], [1], [0, 0, 1, 1], [], []>} : vector<32x512xbf16>, vector<512x512xbf16>, vector<32x512xf32> -> vector<32x512xf32>
    %c0_3 = arith.constant 0 : index
    %c0_4 = arith.constant 0 : index
    %4 = vector.load %arg3[%c0_3, %c0_4] : memref<1x512xf32, #tpu.memory_space<vmem>>, vector<1x512xf32>
    %5 = vector.broadcast %4 : vector<1x512xf32> to vector<32x512xf32>
    %6 = arith.addf %3, %5 : vector<32x512xf32>
    %cst_5 = arith.constant 0.000000e+00 : f32
    %7 = vector.broadcast %cst_5 : f32 to vector<32x512xf32>
    %8 = arith.maximumf %6, %7 : vector<32x512xf32>
    %9 = arith.truncf %8 : vector<32x512xf32> to vector<32x512xbf16>
    %c0_6 = arith.constant 0 : index
    %c0_7 = arith.constant 0 : index
    %10 = vector.load %arg4[%c0_6, %c0_7] : memref<512x512xbf16, #tpu.memory_space<vmem>>, vector<512x512xbf16>
    %cst_8 = arith.constant dense<0.000000e+00> : vector<32x512xf32>
    %11 = tpu.matmul %9, %10, %cst_8 {dimension_numbers = #tpu.dot_dimension_numbers<[1], [0], [0], [1], [0, 0, 1, 1], [], []>} : vector<32x512xbf16>, vector<512x512xbf16>, vector<32x512xf32> -> vector<32x512xf32>
    %c0_9 = arith.constant 0 : index
    %c0_10 = arith.constant 0 : index
    %12 = vector.load %arg5[%c0_9, %c0_10] : memref<1x512xf32, #tpu.memory_space<vmem>>, vector<1x512xf32>
    %13 = vector.broadcast %12 : vector<1x512xf32> to vector<32x512xf32>
    %14 = arith.addf %11, %13 : vector<32x512xf32>
    %cst_11 = arith.constant 0.000000e+00 : f32
    %15 = vector.broadcast %cst_11 : f32 to vector<32x512xf32>
    %16 = arith.maximumf %14, %15 : vector<32x512xf32>
    %17 = arith.truncf %16 : vector<32x512xf32> to vector<32x512xbf16>
    %c0_12 = arith.constant 0 : index
    %c0_13 = arith.constant 0 : index
    %18 = vector.load %arg6[%c0_12, %c0_13] : memref<512x128xbf16, #tpu.memory_space<vmem>>, vector<512x128xbf16>
    %cst_14 = arith.constant dense<0.000000e+00> : vector<32x128xf32>
    %19 = tpu.matmul %17, %18, %cst_14 {dimension_numbers = #tpu.dot_dimension_numbers<[1], [0], [0], [1], [0, 0, 1, 1], [], []>} : vector<32x512xbf16>, vector<512x128xbf16>, vector<32x128xf32> -> vector<32x128xf32>
    %c0_15 = arith.constant 0 : index
    %c0_16 = arith.constant 0 : index
    %20 = vector.load %arg7[%c0_15, %c0_16] : memref<1x128xf32, #tpu.memory_space<vmem>>, vector<1x128xf32>
    %21 = vector.broadcast %20 : vector<1x128xf32> to vector<32x128xf32>
    %22 = arith.addf %19, %21 : vector<32x128xf32>
    %c0_17 = arith.constant 0 : index
    %c0_18 = arith.constant 0 : index
    %23 = vector.load %arg8[%c0_17, %c0_18] : memref<32x128xf32, #tpu.memory_space<vmem>>, vector<32x128xf32>
    tpu.vector_store %arg8[%c0_17, %c0_18], %22 {strides = array<i32>} : memref<32x128xf32, #tpu.memory_space<vmem>>, vector<32x128xf32>,
    return
  }
  func.func @transform_0(%arg0: i32) -> (i32, i32) {
    %c0_i32 = arith.constant 0 : i32
    %c0_i32_0 = arith.constant 0 : i32
    return %arg0, %c0_i32 : i32, i32
  }
  func.func @transform_1(%arg0: i32) -> (i32, i32) {
    %c0_i32 = arith.constant 0 : i32
    %c0_i32_0 = arith.constant 0 : i32
    %c0_i32_1 = arith.constant 0 : i32
    return %c0_i32, %c0_i32_0 : i32, i32
  }
  func.func @transform_2(%arg0: i32) -> (i32, i32) {
    %c0_i32 = arith.constant 0 : i32
    %c0_i32_0 = arith.constant 0 : i32
    %c0_i32_1 = arith.constant 0 : i32
    return %c0_i32, %c0_i32_0 : i32, i32
  }
  func.func @transform_3(%arg0: i32) -> (i32, i32) {
    %c0_i32 = arith.constant 0 : i32
    %c0_i32_0 = arith.constant 0 : i32
    %c0_i32_1 = arith.constant 0 : i32
    return %c0_i32, %c0_i32_0 : i32, i32
  }
  func.func @transform_4(%arg0: i32) -> (i32, i32) {
    %c0_i32 = arith.constant 0 : i32
    %c0_i32_0 = arith.constant 0 : i32
    %c0_i32_1 = arith.constant 0 : i32
    return %c0_i32, %c0_i32_0 : i32, i32
  }
  func.func @transform_5(%arg0: i32) -> (i32, i32) {
    %c0_i32 = arith.constant 0 : i32
    %c0_i32_0 = arith.constant 0 : i32
    %c0_i32_1 = arith.constant 0 : i32
    return %c0_i32, %c0_i32_0 : i32, i32
  }
  func.func @transform_6(%arg0: i32) -> (i32, i32) {
    %c0_i32 = arith.constant 0 : i32
    %c0_i32_0 = arith.constant 0 : i32
    %c0_i32_1 = arith.constant 0 : i32
    return %c0_i32, %c0_i32_0 : i32, i32
  }
  func.func @transform_7(%arg0: i32) -> (i32, i32) {
    %c0_i32 = arith.constant 0 : i32
    %c0_i32_0 = arith.constant 0 : i32
    return %arg0, %c0_i32 : i32, i32
  }
}

</mosaic_0001>

<llo_original>
// kernel: label_predictor_forward.1
$region0: #{label_predictor_forward.1}
  #allocation0 [shape = 'u32[]', space=smem, size = 0x4, offset = 0x4, fixed_abs, tag = 'smem constant byte address 0x4 - core index']
  #allocation1 [shape = 'u32[144,128]{1,0:T(1,128)}', space=vmem, size = 0x12000, scoped, tag = 'internal scratch']
  %s0 = inlined_call_operand.hbm [shape: f32[32,512], index: 0, kind: input, shape index: {}]
  %s1 = inlined_call_operand.hbm [shape: bf16[512,512], index: 1, kind: input, shape index: {}]
  %s2 = inlined_call_operand.hbm [shape: f32[1,512], index: 2, kind: input, shape index: {}]
  %s3 = inlined_call_operand.hbm [shape: bf16[512,512], index: 3, kind: input, shape index: {}]
  %s4 = inlined_call_operand.hbm [shape: f32[1,512], index: 4, kind: input, shape index: {}]
  %s5 = inlined_call_operand.hbm [shape: bf16[512,128], index: 5, kind: input, shape index: {}]
  %s6 = inlined_call_operand.vmem [shape: f32[1,128], index: 6, kind: input, shape index: {}]
  %s7 = inlined_call_operand.vmem [shape: f32[32,128], index: 7, kind: output, shape index: {}]
  %s8 = sld [smem:[#allocation0]]
  $region62: #{label_predictor_forward.1} parent=0
    _
  %s10 = ssub.s32 1, %s8
  %s11 = scalar_select 0, %s10, %s8
  $region1: #{label_predictor_forward.1} parent=0
    #allocation2 [shape = 'u8[65536]{0}', space=vmem, size = 0x10000, scoped, tag = 'input window, operand 0, single buffered']
    #allocation3 [shape = 's32[1]{0}', space=sflag, size = 0x4, scoped, tag = 'scoped memory for label_predictor_forward.1']
    #allocation4 [shape = 'u8[524288]{0}', space=vmem, size = 0x80000, scoped, tag = 'input window, operand 1, single buffered']
    #allocation5 [shape = 's32[1]{0}', space=sflag, size = 0x4, scoped, tag = 'scoped memory for label_predictor_forward.1']
    #allocation6 [shape = 'u8[2048]{0}', space=vmem, size = 0x800, scoped, tag = 'input window, operand 2, single buffered']
    #allocation7 [shape = 'u8[524288]{0}', space=vmem, size = 0x80000, scoped, tag = 'input window, operand 3, single buffered']
    #allocation8 [shape = 's32[1]{0}', space=sflag, size = 0x4, scoped, tag = 'scoped memory for label_predictor_forward.1']
    #allocation9 [shape = 'u8[2048]{0}', space=vmem, size = 0x800, scoped, tag = 'input window, operand 4, single buffered']
    #allocation10 [shape = 'u8[131072]{0}', space=vmem, size = 0x20000, scoped, tag = 'input window, operand 5, single buffered']
    #allocation11 [shape = 's32[1]{0}', space=sflag, size = 0x4, scoped, tag = 'scoped memory for label_predictor_forward.1']
    %12 = vsyncpa [#allocation3], 0
    %13 = vsyncpa [#allocation5], 0
    %14 = vsyncpa [#allocation8], 0
    %15 = vsyncpa [#allocation11], 0
    // Predicated region
    $region2: #{label_predictor_forward.1} parent=1 // pred_check
      _
    $region3: #{label_predictor_forward.1} parent=1 // pred_check_branch
      %17 = sbr.rel (0) target = $region5
    $region4: #{label_predictor_forward.1} parent=1 // pred_region
      %s19 = ssub.s32 2048, 2048
      %20 = vsyncadd [#allocation3], %s19
      %s21 = sshll.u32 [#allocation2], 4
      %s22 = int_to_ptr.vmem [resolvable:$true] %s21
      %27 = dma.hbm_to_vmem [thread:$0]  %s0, 2048, %s22, [#allocation3], 512, 512, 32
    $region5: #{label_predictor_forward.1} parent=1 // pred_fallthru
      _
    // Predicated region
    $region6: #{label_predictor_forward.1} parent=1 // pred_check
      _
    $region7: #{label_predictor_forward.1} parent=1 // pred_check_branch
      %29 = sbr.rel (0) target = $region9
    $region8: #{label_predictor_forward.1} parent=1 // pred_region
      %s31 = ssub.s32 16384, 16384
      %32 = vsyncadd [#allocation5], %s31
      %s33 = sshll.u32 [#allocation4], 4
      %s34 = int_to_ptr.vmem [resolvable:$true] %s33
      %39 = dma.hbm_to_vmem [thread:$0]  %s1, 16384, %s34, [#allocation5], 256, 256, 16
    $region9: #{label_predictor_forward.1} parent=1 // pred_fallthru
      _
    // Predicated region
    $region10: #{label_predictor_forward.1} parent=1 // pred_check
      _
    $region11: #{label_predictor_forward.1} parent=1 // pred_check_branch
      %41 = sbr.rel (0) target = $region13
    $region12: #{label_predictor_forward.1} parent=1 // pred_region
      %s43 = ssub.s32 64, 64
      %44 = vsyncadd [#allocation5], %s43
      %s46 = sshll.u32 [#allocation6], 4
      %s47 = int_to_ptr.vmem [resolvable:$true] %s46
      %49 = dma.hbm_to_vmem [thread:$0]  %s2, 64, %s47, [#allocation5]
    $region13: #{label_predictor_forward.1} parent=1 // pred_fallthru
      _
    // Predicated region
    $region14: #{label_predictor_forward.1} parent=1 // pred_check
      _
    $region15: #{label_predictor_forward.1} parent=1 // pred_check_branch
      %51 = sbr.rel (0) target = $region17
    $region16: #{label_predictor_forward.1} parent=1 // pred_region
      %s53 = ssub.s32 16384, 16384
      %54 = vsyncadd [#allocation8], %s53
      %s55 = sshll.u32 [#allocation7], 4
      %s56 = int_to_ptr.vmem [resolvable:$true] %s55
      %61 = dma.hbm_to_vmem [thread:$0]  %s3, 16384, %s56, [#allocation8], 256, 256, 16
    $region17: #{label_predictor_forward.1} parent=1 // pred_fallthru
      _
    // Predicated region
    $region18: #{label_predictor_forward.1} parent=1 // pred_check
      _
    $region19: #{label_predictor_forward.1} parent=1 // pred_check_branch
      %63 = sbr.rel (0) target = $region21
    $region20: #{label_predictor_forward.1} parent=1 // pred_region
      %s65 = ssub.s32 64, 64
      %66 = vsyncadd [#allocation8], %s65
      %s68 = sshll.u32 [#allocation9], 4
      %s69 = int_to_ptr.vmem [resolvable:$true] %s68
      %71 = dma.hbm_to_vmem [thread:$0]  %s4, 64, %s69, [#allocation8]
    $region21: #{label_predictor_forward.1} parent=1 // pred_fallthru
      _
    // Predicated region
    $region22: #{label_predictor_forward.1} parent=1 // pred_check
      _
    $region23: #{label_predictor_forward.1} parent=1 // pred_check_branch
      %73 = sbr.rel (0) target = $region25
    $region24: #{label_predictor_forward.1} parent=1 // pred_region
      %s75 = ssub.s32 4096, 4096
      %76 = vsyncadd [#allocation11], %s75
      %s77 = sshll.u32 [#allocation10], 4
      %s78 = int_to_ptr.vmem [resolvable:$true] %s77
      %83 = dma.hbm_to_vmem [thread:$0]  %s5, 4096, %s78, [#allocation11], 64, 64, 4
    $region25: #{label_predictor_forward.1} parent=1 // pred_fallthru
      _
    // Predicated region
    $region26: #{label_predictor_forward.1} parent=1 // pred_check
      _
    $region27: #{label_predictor_forward.1} parent=1 // pred_check_branch
      %85 = sbr.rel (0) target = $region29
    $region28: #{label_predictor_forward.1} parent=1 // pred_region
      _
    $region29: #{label_predictor_forward.1} parent=1 // pred_fallthru
      _
    // Predicated region
    $region30: #{label_predictor_forward.1} parent=1 // pred_check
      _
    $region31: #{label_predictor_forward.1} parent=1 // pred_check_branch
      %87 = sbr.rel (0) target = $region33
    $region32: #{label_predictor_forward.1} parent=1 // pred_region
      %88 = dma.done [#allocation3], 2048
    $region33: #{label_predictor_forward.1} parent=1 // pred_fallthru
      _
    // Predicated region
    $region34: #{label_predictor_forward.1} parent=1 // pred_check
      _
    $region35: #{label_predictor_forward.1} parent=1 // pred_check_branch
      %90 = sbr.rel (0) target = $region37
    $region36: #{label_predictor_forward.1} parent=1 // pred_region
      %91 = dma.done [#allocation5], 16384
    $region37: #{label_predictor_forward.1} parent=1 // pred_fallthru
      _
    // Predicated region
    $region38: #{label_predictor_forward.1} parent=1 // pred_check
      _
    $region39: #{label_predictor_forward.1} parent=1 // pred_check_branch
      %93 = sbr.rel (0) target = $region41
    $region40: #{label_predictor_forward.1} parent=1 // pred_region
      %94 = dma.done [#allocation5], 64
    $region41: #{label_predictor_forward.1} parent=1 // pred_fallthru
      _
    // Predicated region
    $region42: #{label_predictor_forward.1} parent=1 // pred_check
      _
    $region43: #{label_predictor_forward.1} parent=1 // pred_check_branch
      %96 = sbr.rel (0) target = $region45
    $region44: #{label_predictor_forward.1} parent=1 // pred_region
      %97 = dma.done [#allocation8], 16384
    $region45: #{label_predictor_forward.1} parent=1 // pred_fallthru
      _
    // Predicated region
    $region46: #{label_predictor_forward.1} parent=1 // pred_check
      _
    $region47: #{label_predictor_forward.1} parent=1 // pred_check_branch
      %99 = sbr.rel (0) target = $region49
    $region48: #{label_predictor_forward.1} parent=1 // pred_region
      %100 = dma.done [#allocation8], 64
    $region49: #{label_predictor_forward.1} parent=1 // pred_fallthru
      _
    // Predicated region
    $region50: #{label_predictor_forward.1} parent=1 // pred_check
      _
    $region51: #{label_predictor_forward.1} parent=1 // pred_check_branch
      %102 = sbr.rel (0) target = $region53
    $region52: #{label_predictor_forward.1} parent=1 // pred_region
      %103 = dma.done [#allocation11], 4096
    $region53: #{label_predictor_forward.1} parent=1 // pred_fallthru
      _
    %v105 = vld [vmem:[#allocation2] sm:$0xff]
    %v106 = vld [vmem:[#allocation2 + $0x8] sm:$0xff]
    %v107 = vld [vmem:[#allocation2 + $0x10] sm:$0xff]
    %v108 = vld [vmem:[#allocation2 + $0x18] sm:$0xff]
    %v109 = vld [vmem:[#allocation2 + $0x20] sm:$0xff]
    %v110 = vld [vmem:[#allocation2 + $0x28] sm:$0xff]
    %v111 = vld [vmem:[#allocation2 + $0x30] sm:$0xff]
    %v112 = vld [vmem:[#allocation2 + $0x38] sm:$0xff]
    %v113 = vld [vmem:[#allocation2 + $0x40] sm:$0xff]
    %v114 = vld [vmem:[#allocation2 + $0x48] sm:$0xff]
    %v115 = vld [vmem:[#allocation2 + $0x50] sm:$0xff]
    %v116 = vld [vmem:[#allocation2 + $0x58] sm:$0xff]
    %v117 = vld [vmem:[#allocation2 + $0x60] sm:$0xff]
    %v118 = vld [vmem:[#allocation2 + $0x68] sm:$0xff]
    %v119 = vld [vmem:[#allocation2 + $0x70] sm:$0xff]
    %v120 = vld [vmem:[#allocation2 + $0x78] sm:$0xff]
    %v121 = vpack.c.bf16 %v109, %v105
    %v122 = vpack.c.bf16 %v110, %v106
    %v123 = vpack.c.bf16 %v111, %v107
    %v124 = vpack.c.bf16 %v112, %v108
    %v125 = vpack.c.bf16 %v117, %v113
    %v126 = vpack.c.bf16 %v118, %v114
    %v127 = vpack.c.bf16 %v119, %v115
    %v128 = vpack.c.bf16 %v120, %v116
    %v129 = vld [vmem:[#allocation4] sm:$0xff]
    %v130 = vld [vmem:[#allocation4 + $0x8] sm:$0xff]
    %v131 = vld [vmem:[#allocation4 + $0x10] sm:$0xff]
    %v132 = vld [vmem:[#allocation4 + $0x18] sm:$0xff]
    %v133 = vld [vmem:[#allocation4 + $0x20] sm:$0xff]
    %v134 = vld [vmem:[#allocation4 + $0x28] sm:$0xff]
    %v135 = vld [vmem:[#allocation4 + $0x30] sm:$0xff]
    %v136 = vld [vmem:[#allocation4 + $0x38] sm:$0xff]
    %v137 = vld [vmem:[#allocation4 + $0x40] sm:$0xff]
    %v138 = vld [vmem:[#allocation4 + $0x48] sm:$0xff]
    %v139 = vld [vmem:[#allocation4 + $0x50] sm:$0xff]
    %v140 = vld [vmem:[#allocation4 + $0x58] sm:$0xff]
    %v141 = vld [vmem:[#allocation4 + $0x60] sm:$0xff]
    %v142 = vld [vmem:[#allocation4 + $0x68] sm:$0xff]
    %v143 = vld [vmem:[#allocation4 + $0x70] sm:$0xff]
    %v144 = vld [vmem:[#allocation4 + $0x78] sm:$0xff]
    %v145 = vld [vmem:[#allocation4 + $0x80] sm:$0xff]
    %v146 = vld [vmem:[#allocation4 + $0x88] sm:$0xff]
    %v147 = vld [vmem:[#allocation4 + $0x90] sm:$0xff]
    %v148 = vld [vmem:[#allocation4 + $0x98] sm:$0xff]
    %v149 = vld [vmem:[#allocation4 + $0xa0] sm:$0xff]
    %v150 = vld [vmem:[#allocation4 + $0xa8] sm:$0xff]
    %v151 = vld [vmem:[#allocation4 + $0xb0] sm:$0xff]
    %v152 = vld [vmem:[#allocation4 + $0xb8] sm:$0xff]
    %v153 = vld [vmem:[#allocation4 + $0xc0] sm:$0xff]
    %v154 = vld [vmem:[#allocation4 + $0xc8] sm:$0xff]
    %v155 = vld [vmem:[#allocation4 + $0xd0] sm:$0xff]
    %v156 = vld [vmem:[#allocation4 + $0xd8] sm:$0xff]
    %v157 = vld [vmem:[#allocation4 + $0xe0] sm:$0xff]
    %v158 = vld [vmem:[#allocation4 + $0xe8] sm:$0xff]
    %v159 = vld [vmem:[#allocation4 + $0xf0] sm:$0xff]
    %v160 = vld [vmem:[#allocation4 + $0xf8] sm:$0xff]
    %v161 = vld [vmem:[#allocation4 + $0x100] sm:$0xff]
    %v162 = vld [vmem:[#allocation4 + $0x108] sm:$0xff]
    %v163 = vld [vmem:[#allocation4 + $0x110] sm:$0xff]
    %v164 = vld [vmem:[#allocation4 + $0x118] sm:$0xff]
    %v165 = vld [vmem:[#allocation4 + $0x120] sm:$0xff]
    %v166 = vld [vmem:[#allocation4 + $0x128] sm:$0xff]
    %v167 = vld [vmem:[#allocation4 + $0x130] sm:$0xff]
    %v168 = vld [vmem:[#allocation4 + $0x138] sm:$0xff]
    %v169 = vld [vmem:[#allocation4 + $0x140] sm:$0xff]
    %v170 = vld [vmem:[#allocation4 + $0x148] sm:$0xff]
    %v171 = vld [vmem:[#allocation4 + $0x150] sm:$0xff]
    %v172 = vld [vmem:[#allocation4 + $0x158] sm:$0xff]
    %v173 = vld [vmem:[#allocation4 + $0x160] sm:$0xff]
    %v174 = vld [vmem:[#allocation4 + $0x168] sm:$0xff]
    %v175 = vld [vmem:[#allocation4 + $0x170] sm:$0xff]
    %v176 = vld [vmem:[#allocation4 + $0x178] sm:$0xff]
    %v177 = vld [vmem:[#allocation4 + $0x180] sm:$0xff]
    %v178 = vld [vmem:[#allocation4 + $0x188] sm:$0xff]
    %v179 = vld [vmem:[#allocation4 + $0x190] sm:$0xff]
    %v180 = vld [vmem:[#allocation4 + $0x198] sm:$0xff]
    %v181 = vld [vmem:[#allocation4 + $0x1a0] sm:$0xff]
    %v182 = vld [vmem:[#allocation4 + $0x1a8] sm:$0xff]
    %v183 = vld [vmem:[#allocation4 + $0x1b0] sm:$0xff]
    %v184 = vld [vmem:[#allocation4 + $0x1b8] sm:$0xff]
    %v185 = vld [vmem:[#allocation4 + $0x1c0] sm:$0xff]
    %v186 = vld [vmem:[#allocation4 + $0x1c8] sm:$0xff]
    %v187 = vld [vmem:[#allocation4 + $0x1d0] sm:$0xff]
    %v188 = vld [vmem:[#allocation4 + $0x1d8] sm:$0xff]
    %v189 = vld [vmem:[#allocation4 + $0x1e0] sm:$0xff]
    %v190 = vld [vmem:[#allocation4 + $0x1e8] sm:$0xff]
    %v191 = vld [vmem:[#allocation4 + $0x1f0] sm:$0xff]
    %v192 = vld [vmem:[#allocation4 + $0x1f8] sm:$0xff]
    %v193 = vld [vmem:[#allocation4 + $0x200] sm:$0xff]
    %v194 = vld [vmem:[#allocation4 + $0x208] sm:$0xff]
    %v195 = vld [vmem:[#allocation4 + $0x210] sm:$0xff]
    %v196 = vld [vmem:[#allocation4 + $0x218] sm:$0xff]
    %v197 = vld [vmem:[#allocation4 + $0x220] sm:$0xff]
    %v198 = vld [vmem:[#allocation4 + $0x228] sm:$0xff]
    %v199 = vld [vmem:[#allocation4 + $0x230] sm:$0xff]
    %v200 = vld [vmem:[#allocation4 + $0x238] sm:$0xff]
    %v201 = vld [vmem:[#allocation4 + $0x240] sm:$0xff]
    %v202 = vld [vmem:[#allocation4 + $0x248] sm:$0xff]
    %v203 = vld [vmem:[#allocation4 + $0x250] sm:$0xff]
    %v204 = vld [vmem:[#allocation4 + $0x258] sm:$0xff]
    %v205 = vld [vmem:[#allocation4 + $0x260] sm:$0xff]
    %v206 = vld [vmem:[#allocation4 + $0x268] sm:$0xff]
    %v207 = vld [vmem:[#allocation4 + $0x270] sm:$0xff]
    %v208 = vld [vmem:[#allocation4 + $0x278] sm:$0xff]
    %v209 = vld [vmem:[#allocation4 + $0x280] sm:$0xff]
    %v210 = vld [vmem:[#allocation4 + $0x288] sm:$0xff]
    %v211 = vld [vmem:[#allocation4 + $0x290] sm:$0xff]
    %v212 = vld [vmem:[#allocation4 + $0x298] sm:$0xff]
    %v213 = vld [vmem:[#allocation4 + $0x2a0] sm:$0xff]
    %v214 = vld [vmem:[#allocation4 + $0x2a8] sm:$0xff]
    %v215 = vld [vmem:[#allocation4 + $0x2b0] sm:$0xff]
    %v216 = vld [vmem:[#allocation4 + $0x2b8] sm:$0xff]
    %v217 = vld [vmem:[#allocation4 + $0x2c0] sm:$0xff]
    %v218 = vld [vmem:[#allocation4 + $0x2c8] sm:$0xff]
    %v219 = vld [vmem:[#allocation4 + $0x2d0] sm:$0xff]
    %v220 = vld [vmem:[#allocation4 + $0x2d8] sm:$0xff]
    %v221 = vld [vmem:[#allocation4 + $0x2e0] sm:$0xff]
    %v222 = vld [vmem:[#allocation4 + $0x2e8] sm:$0xff]
    %v223 = vld [vmem:[#allocation4 + $0x2f0] sm:$0xff]
    %v224 = vld [vmem:[#allocation4 + $0x2f8] sm:$0xff]
    %v225 = vld [vmem:[#allocation4 + $0x300] sm:$0xff]
    %v226 = vld [vmem:[#allocation4 + $0x308] sm:$0xff]
    %v227 = vld [vmem:[#allocation4 + $0x310] sm:$0xff]
    %v228 = vld [vmem:[#allocation4 + $0x318] sm:$0xff]
    %v229 = vld [vmem:[#allocation4 + $0x320] sm:$0xff]
    %v230 = vld [vmem:[#allocation4 + $0x328] sm:$0xff]
    %v231 = vld [vmem:[#allocation4 + $0x330] sm:$0xff]
    %v232 = vld [vmem:[#allocation4 + $0x338] sm:$0xff]
    %v233 = vld [vmem:[#allocation4 + $0x340] sm:$0xff]
    %v234 = vld [vmem:[#allocation4 + $0x348] sm:$0xff]
    %v235 = vld [vmem:[#allocation4 + $0x350] sm:$0xff]
    %v236 = vld [vmem:[#allocation4 + $0x358] sm:$0xff]
    %v237 = vld [vmem:[#allocation4 + $0x360] sm:$0xff]
    %v238 = vld [vmem:[#allocation4 + $0x368] sm:$0xff]
    %v239 = vld [vmem:[#allocation4 + $0x370] sm:$0xff]
    %v240 = vld [vmem:[#allocation4 + $0x378] sm:$0xff]
    %v241 = vld [vmem:[#allocation4 + $0x380] sm:$0xff]
    %v242 = vld [vmem:[#allocation4 + $0x388] sm:$0xff]
    %v243 = vld [vmem:[#allocation4 + $0x390] sm:$0xff]
    %v244 = vld [vmem:[#allocation4 + $0x398] sm:$0xff]
    %v245 = vld [vmem:[#allocation4 + $0x3a0] sm:$0xff]
    %v246 = vld [vmem:[#allocation4 + $0x3a8] sm:$0xff]
    %v247 = vld [vmem:[#allocation4 + $0x3b0] sm:$0xff]
    %v248 = vld [vmem:[#allocation4 + $0x3b8] sm:$0xff]
    %v249 = vld [vmem:[#allocation4 + $0x3c0] sm:$0xff]
    %v250 = vld [vmem:[#allocation4 + $0x3c8] sm:$0xff]
    %v251 = vld [vmem:[#allocation4 + $0x3d0] sm:$0xff]
    %v252 = vld [vmem:[#allocation4 + $0x3d8] sm:$0xff]
    %v253 = vld [vmem:[#allocation4 + $0x3e0] sm:$0xff]
    %v254 = vld [vmem:[#allocation4 + $0x3e8] sm:$0xff]
    %v255 = vld [vmem:[#allocation4 + $0x3f0] sm:$0xff]
    %v256 = vld [vmem:[#allocation4 + $0x3f8] sm:$0xff]
    %v257 = vld [vmem:[#allocation6] sm:$0xf]
    %v259 = vlaneseq
    %v260 = vshrl.u32 %v259, 7
    %v261 = vsub.s32 0, %v260
    %v262 = vrot.slane %v257, %v261
    %v263 = vlaneseq
    %v264 = vshrl.u32 %v263, 7
    %v265 = vsub.s32 1, %v264
    %v266 = vrot.slane %v257, %v265
    %v267 = vlaneseq
    %v268 = vshrl.u32 %v267, 7
    %v269 = vsub.s32 2, %v268
    %v270 = vrot.slane %v257, %v269
    %v271 = vlaneseq
    %v272 = vshrl.u32 %v271, 7
    %v273 = vsub.s32 3, %v272
    %v274 = vrot.slane %v257, %v273
    %v407 = vunpack.c.l.b16 %v129
    %v408 = vunpack.c.h.b16 %v129
    %v409 = vunpack.c.l.b16 %v130
    %v410 = vunpack.c.h.b16 %v130
    %v411 = vunpack.c.l.b16 %v131
    %v412 = vunpack.c.h.b16 %v131
    %v413 = vunpack.c.l.b16 %v132
    %v414 = vunpack.c.h.b16 %v132
    %v415 = vunpack.c.l.b16 %v133
    %v416 = vunpack.c.h.b16 %v133
    %v417 = vunpack.c.l.b16 %v134
    %v418 = vunpack.c.h.b16 %v134
    %v419 = vunpack.c.l.b16 %v135
    %v420 = vunpack.c.h.b16 %v135
    %v421 = vunpack.c.l.b16 %v136
    %v422 = vunpack.c.h.b16 %v136
    %v423 = vunpack.c.l.b16 %v137
    %v424 = vunpack.c.h.b16 %v137
    %v425 = vunpack.c.l.b16 %v138
    %v426 = vunpack.c.h.b16 %v138
    %v427 = vunpack.c.l.b16 %v139
    %v428 = vunpack.c.h.b16 %v139
    %v429 = vunpack.c.l.b16 %v140
    %v430 = vunpack.c.h.b16 %v140
    %v431 = vunpack.c.l.b16 %v141
    %v432 = vunpack.c.h.b16 %v141
    %v433 = vunpack.c.l.b16 %v142
    %v434 = vunpack.c.h.b16 %v142
    %v435 = vunpack.c.l.b16 %v143
    %v436 = vunpack.c.h.b16 %v143
    %v437 = vunpack.c.l.b16 %v144
    %v438 = vunpack.c.h.b16 %v144
    %v439 = vunpack.c.l.b16 %v145
    %v440 = vunpack.c.h.b16 %v145
    %v441 = vunpack.c.l.b16 %v146
    %v442 = vunpack.c.h.b16 %v146
    %v443 = vunpack.c.l.b16 %v147
    %v444 = vunpack.c.h.b16 %v147
    %v445 = vunpack.c.l.b16 %v148
    %v446 = vunpack.c.h.b16 %v148
    %v447 = vunpack.c.l.b16 %v149
    %v448 = vunpack.c.h.b16 %v149
    %v449 = vunpack.c.l.b16 %v150
    %v450 = vunpack.c.h.b16 %v150
    %v451 = vunpack.c.l.b16 %v151
    %v452 = vunpack.c.h.b16 %v151
    %v453 = vunpack.c.l.b16 %v152
    %v454 = vunpack.c.h.b16 %v152
    %v455 = vunpack.c.l.b16 %v153
    %v456 = vunpack.c.h.b16 %v153
    %v457 = vunpack.c.l.b16 %v154
    %v458 = vunpack.c.h.b16 %v154
    %v459 = vunpack.c.l.b16 %v155
    %v460 = vunpack.c.h.b16 %v155
    %v461 = vunpack.c.l.b16 %v156
    %v462 = vunpack.c.h.b16 %v156
    %v463 = vunpack.c.l.b16 %v157
    %v464 = vunpack.c.h.b16 %v157
    %v465 = vunpack.c.l.b16 %v158
    %v466 = vunpack.c.h.b16 %v158
    %v467 = vunpack.c.l.b16 %v159
    %v468 = vunpack.c.h.b16 %v159
    %v469 = vunpack.c.l.b16 %v160
    %v470 = vunpack.c.h.b16 %v160
    %v471 = vunpack.c.l.b16 %v161
    %v472 = vunpack.c.h.b16 %v161
    %v473 = vunpack.c.l.b16 %v162
    %v474 = vunpack.c.h.b16 %v162
    %v475 = vunpack.c.l.b16 %v163
    %v476 = vunpack.c.h.b16 %v163
    %v477 = vunpack.c.l.b16 %v164
    %v478 = vunpack.c.h.b16 %v164
    %v479 = vunpack.c.l.b16 %v165
    %v480 = vunpack.c.h.b16 %v165
    %v481 = vunpack.c.l.b16 %v166
    %v482 = vunpack.c.h.b16 %v166
    %v483 = vunpack.c.l.b16 %v167
    %v484 = vunpack.c.h.b16 %v167
    %v485 = vunpack.c.l.b16 %v168
    %v486 = vunpack.c.h.b16 %v168
    %v487 = vunpack.c.l.b16 %v169
    %v488 = vunpack.c.h.b16 %v169
    %v489 = vunpack.c.l.b16 %v170
    %v490 = vunpack.c.h.b16 %v170
    %v491 = vunpack.c.l.b16 %v171
    %v492 = vunpack.c.h.b16 %v171
    %v493 = vunpack.c.l.b16 %v172
    %v494 = vunpack.c.h.b16 %v172
    %v495 = vunpack.c.l.b16 %v173
    %v496 = vunpack.c.h.b16 %v173
    %v497 = vunpack.c.l.b16 %v174
    %v498 = vunpack.c.h.b16 %v174
    %v499 = vunpack.c.l.b16 %v175
    %v500 = vunpack.c.h.b16 %v175
    %v501 = vunpack.c.l.b16 %v176
    %v502 = vunpack.c.h.b16 %v176
    %v503 = vunpack.c.l.b16 %v177
    %v504 = vunpack.c.h.b16 %v177
    %v505 = vunpack.c.l.b16 %v178
    %v506 = vunpack.c.h.b16 %v178
    %v507 = vunpack.c.l.b16 %v179
    %v508 = vunpack.c.h.b16 %v179
    %v509 = vunpack.c.l.b16 %v180
    %v510 = vunpack.c.h.b16 %v180
    %v511 = vunpack.c.l.b16 %v181
    %v512 = vunpack.c.h.b16 %v181
    %v513 = vunpack.c.l.b16 %v182
    %v514 = vunpack.c.h.b16 %v182
    %v515 = vunpack.c.l.b16 %v183
    %v516 = vunpack.c.h.b16 %v183
    %v517 = vunpack.c.l.b16 %v184
    %v518 = vunpack.c.h.b16 %v184
    %v519 = vunpack.c.l.b16 %v185
    %v520 = vunpack.c.h.b16 %v185
    %v521 = vunpack.c.l.b16 %v186
    %v522 = vunpack.c.h.b16 %v186
    %v523 = vunpack.c.l.b16 %v187
    %v524 = vunpack.c.h.b16 %v187
    %v525 = vunpack.c.l.b16 %v188
    %v526 = vunpack.c.h.b16 %v188
    %v527 = vunpack.c.l.b16 %v189
    %v528 = vunpack.c.h.b16 %v189
    %v529 = vunpack.c.l.b16 %v190
    %v530 = vunpack.c.h.b16 %v190
    %v531 = vunpack.c.l.b16 %v191
    %v532 = vunpack.c.h.b16 %v191
    %v533 = vunpack.c.l.b16 %v192
    %v534 = vunpack.c.h.b16 %v192
    %v535 = vunpack.c.l.b16 %v193
    %v536 = vunpack.c.h.b16 %v193
    %v537 = vunpack.c.l.b16 %v194
    %v538 = vunpack.c.h.b16 %v194
    %v539 = vunpack.c.l.b16 %v195
    %v540 = vunpack.c.h.b16 %v195
    %v541 = vunpack.c.l.b16 %v196
    %v542 = vunpack.c.h.b16 %v196
    %v543 = vunpack.c.l.b16 %v197
    %v544 = vunpack.c.h.b16 %v197
    %v545 = vunpack.c.l.b16 %v198
    %v546 = vunpack.c.h.b16 %v198
    %v547 = vunpack.c.l.b16 %v199
    %v548 = vunpack.c.h.b16 %v199
    %v549 = vunpack.c.l.b16 %v200
    %v550 = vunpack.c.h.b16 %v200
    %v551 = vunpack.c.l.b16 %v201
    %v552 = vunpack.c.h.b16 %v201
    %v553 = vunpack.c.l.b16 %v202
    %v554 = vunpack.c.h.b16 %v202
    %v555 = vunpack.c.l.b16 %v203
    %v556 = vunpack.c.h.b16 %v203
    %v557 = vunpack.c.l.b16 %v204
    %v558 = vunpack.c.h.b16 %v204
    %v559 = vunpack.c.l.b16 %v205
    %v560 = vunpack.c.h.b16 %v205
    %v561 = vunpack.c.l.b16 %v206
    %v562 = vunpack.c.h.b16 %v206
    %v563 = vunpack.c.l.b16 %v207
    %v564 = vunpack.c.h.b16 %v207
    %v565 = vunpack.c.l.b16 %v208
    %v566 = vunpack.c.h.b16 %v208
    %v567 = vunpack.c.l.b16 %v209
    %v568 = vunpack.c.h.b16 %v209
    %v569 = vunpack.c.l.b16 %v210
    %v570 = vunpack.c.h.b16 %v210
    %v571 = vunpack.c.l.b16 %v211
    %v572 = vunpack.c.h.b16 %v211
    %v573 = vunpack.c.l.b16 %v212
    %v574 = vunpack.c.h.b16 %v212
    %v575 = vunpack.c.l.b16 %v213
    %v576 = vunpack.c.h.b16 %v213
    %v577 = vunpack.c.l.b16 %v214
    %v578 = vunpack.c.h.b16 %v214
    %v579 = vunpack.c.l.b16 %v215
    %v580 = vunpack.c.h.b16 %v215
    %v581 = vunpack.c.l.b16 %v216
    %v582 = vunpack.c.h.b16 %v216
    %v583 = vunpack.c.l.b16 %v217
    %v584 = vunpack.c.h.b16 %v217
    %v585 = vunpack.c.l.b16 %v218
    %v586 = vunpack.c.h.b16 %v218
    %v587 = vunpack.c.l.b16 %v219
    %v588 = vunpack.c.h.b16 %v219
    %v589 = vunpack.c.l.b16 %v220
    %v590 = vunpack.c.h.b16 %v220
    %v591 = vunpack.c.l.b16 %v221
    %v592 = vunpack.c.h.b16 %v221
    %v593 = vunpack.c.l.b16 %v222
    %v594 = vunpack.c.h.b16 %v222
    %v595 = vunpack.c.l.b16 %v223
    %v596 = vunpack.c.h.b16 %v223
    %v597 = vunpack.c.l.b16 %v224
    %v598 = vunpack.c.h.b16 %v224
    %v599 = vunpack.c.l.b16 %v225
    %v600 = vunpack.c.h.b16 %v225
    %v601 = vunpack.c.l.b16 %v226
    %v602 = vunpack.c.h.b16 %v226
    %v603 = vunpack.c.l.b16 %v227
    %v604 = vunpack.c.h.b16 %v227
    %v605 = vunpack.c.l.b16 %v228
    %v606 = vunpack.c.h.b16 %v228
    %v607 = vunpack.c.l.b16 %v229
    %v608 = vunpack.c.h.b16 %v229
    %v609 = vunpack.c.l.b16 %v230
    %v610 = vunpack.c.h.b16 %v230
    %v611 = vunpack.c.l.b16 %v231
    %v612 = vunpack.c.h.b16 %v231
    %v613 = vunpack.c.l.b16 %v232
    %v614 = vunpack.c.h.b16 %v232
    %v615 = vunpack.c.l.b16 %v233
    %v616 = vunpack.c.h.b16 %v233
    %v617 = vunpack.c.l.b16 %v234
    %v618 = vunpack.c.h.b16 %v234
    %v619 = vunpack.c.l.b16 %v235
    %v620 = vunpack.c.h.b16 %v235
    %v621 = vunpack.c.l.b16 %v236
    %v622 = vunpack.c.h.b16 %v236
    %v623 = vunpack.c.l.b16 %v237
    %v624 = vunpack.c.h.b16 %v237
    %v625 = vunpack.c.l.b16 %v238
    %v626 = vunpack.c.h.b16 %v238
    %v627 = vunpack.c.l.b16 %v239
    %v628 = vunpack.c.h.b16 %v239
    %v629 = vunpack.c.l.b16 %v240
    %v630 = vunpack.c.h.b16 %v240
    %v631 = vunpack.c.l.b16 %v241
    %v632 = vunpack.c.h.b16 %v241
    %v633 = vunpack.c.l.b16 %v242
    %v634 = vunpack.c.h.b16 %v242
    %v635 = vunpack.c.l.b16 %v243
    %v636 = vunpack.c.h.b16 %v243
    %v637 = vunpack.c.l.b16 %v244
    %v638 = vunpack.c.h.b16 %v244
    %v639 = vunpack.c.l.b16 %v245
    %v640 = vunpack.c.h.b16 %v245
    %v641 = vunpack.c.l.b16 %v246
    %v642 = vunpack.c.h.b16 %v246
    %v643 = vunpack.c.l.b16 %v247
    %v644 = vunpack.c.h.b16 %v247
    %v645 = vunpack.c.l.b16 %v248
    %v646 = vunpack.c.h.b16 %v248
    %v647 = vunpack.c.l.b16 %v249
    %v648 = vunpack.c.h.b16 %v249
    %v649 = vunpack.c.l.b16 %v250
    %v650 = vunpack.c.h.b16 %v250
    %v651 = vunpack.c.l.b16 %v251
    %v652 = vunpack.c.h.b16 %v251
    %v653 = vunpack.c.l.b16 %v252
    %v654 = vunpack.c.h.b16 %v252
    %v655 = vunpack.c.l.b16 %v253
    %v656 = vunpack.c.h.b16 %v253
    %v657 = vunpack.c.l.b16 %v254
    %v658 = vunpack.c.h.b16 %v254
    %v659 = vunpack.c.l.b16 %v255
    %v660 = vunpack.c.h.b16 %v255
    %v661 = vunpack.c.l.b16 %v256
    %v662 = vunpack.c.h.b16 %v256
    %v663 = vpack.c.b16 %v411, %v407
    %v664 = vpack.c.b16 %v412, %v408
    %v665 = vpack.c.b16 %v413, %v409
    %v666 = vpack.c.b16 %v414, %v410
    %v667 = vpack.c.b16 %v419, %v415
    %v668 = vpack.c.b16 %v420, %v416
    %v669 = vpack.c.b16 %v421, %v417
    %v670 = vpack.c.b16 %v422, %v418
    %v671 = vpack.c.b16 %v427, %v423
    %v672 = vpack.c.b16 %v428, %v424
    %v673 = vpack.c.b16 %v429, %v425
    %v674 = vpack.c.b16 %v430, %v426
    %v675 = vpack.c.b16 %v435, %v431
    %v676 = vpack.c.b16 %v436, %v432
    %v677 = vpack.c.b16 %v437, %v433
    %v678 = vpack.c.b16 %v438, %v434
    %v679 = vpack.c.b16 %v443, %v439
    %v680 = vpack.c.b16 %v444, %v440
    %v681 = vpack.c.b16 %v445, %v441
    %v682 = vpack.c.b16 %v446, %v442
    %v683 = vpack.c.b16 %v451, %v447
    %v684 = vpack.c.b16 %v452, %v448
    %v685 = vpack.c.b16 %v453, %v449
    %v686 = vpack.c.b16 %v454, %v450
    %v687 = vpack.c.b16 %v459, %v455
    %v688 = vpack.c.b16 %v460, %v456
    %v689 = vpack.c.b16 %v461, %v457
    %v690 = vpack.c.b16 %v462, %v458
    %v691 = vpack.c.b16 %v467, %v463
    %v692 = vpack.c.b16 %v468, %v464
    %v693 = vpack.c.b16 %v469, %v465
    %v694 = vpack.c.b16 %v470, %v466
    %v695 = vpack.c.b16 %v475, %v471
    %v696 = vpack.c.b16 %v476, %v472
    %v697 = vpack.c.b16 %v477, %v473
    %v698 = vpack.c.b16 %v478, %v474
    %v699 = vpack.c.b16 %v483, %v479
    %v700 = vpack.c.b16 %v484, %v480
    %v701 = vpack.c.b16 %v485, %v481
    %v702 = vpack.c.b16 %v486, %v482
    %v703 = vpack.c.b16 %v491, %v487
    %v704 = vpack.c.b16 %v492, %v488
    %v705 = vpack.c.b16 %v493, %v489
    %v706 = vpack.c.b16 %v494, %v490
    %v707 = vpack.c.b16 %v499, %v495
    %v708 = vpack.c.b16 %v500, %v496
    %v709 = vpack.c.b16 %v501, %v497
    %v710 = vpack.c.b16 %v502, %v498
    %v711 = vpack.c.b16 %v507, %v503
    %v712 = vpack.c.b16 %v508, %v504
    %v713 = vpack.c.b16 %v509, %v505
    %v714 = vpack.c.b16 %v510, %v506
    %v715 = vpack.c.b16 %v515, %v511
    %v716 = vpack.c.b16 %v516, %v512
    %v717 = vpack.c.b16 %v517, %v513
    %v718 = vpack.c.b16 %v518, %v514
    %v719 = vpack.c.b16 %v523, %v519
    %v720 = vpack.c.b16 %v524, %v520
    %v721 = vpack.c.b16 %v525, %v521
    %v722 = vpack.c.b16 %v526, %v522
    %v723 = vpack.c.b16 %v531, %v527
    %v724 = vpack.c.b16 %v532, %v528
    %v725 = vpack.c.b16 %v533, %v529
    %v726 = vpack.c.b16 %v534, %v530
    %v727 = vpack.c.b16 %v539, %v535
    %v728 = vpack.c.b16 %v540, %v536
    %v729 = vpack.c.b16 %v541, %v537
    %v730 = vpack.c.b16 %v542, %v538
    %v731 = vpack.c.b16 %v547, %v543
    %v732 = vpack.c.b16 %v548, %v544
    %v733 = vpack.c.b16 %v549, %v545
    %v734 = vpack.c.b16 %v550, %v546
    %v735 = vpack.c.b16 %v555, %v551
    %v736 = vpack.c.b16 %v556, %v552
    %v737 = vpack.c.b16 %v557, %v553
    %v738 = vpack.c.b16 %v558, %v554
    %v739 = vpack.c.b16 %v563, %v559
    %v740 = vpack.c.b16 %v564, %v560
    %v741 = vpack.c.b16 %v565, %v561
    %v742 = vpack.c.b16 %v566, %v562
    %v743 = vpack.c.b16 %v571, %v567
    %v744 = vpack.c.b16 %v572, %v568
    %v745 = vpack.c.b16 %v573, %v569
    %v746 = vpack.c.b16 %v574, %v570
    %v747 = vpack.c.b16 %v579, %v575
    %v748 = vpack.c.b16 %v580, %v576
    %v749 = vpack.c.b16 %v581, %v577
    %v750 = vpack.c.b16 %v582, %v578
    %v751 = vpack.c.b16 %v587, %v583
    %v752 = vpack.c.b16 %v588, %v584
    %v753 = vpack.c.b16 %v589, %v585
    %v754 = vpack.c.b16 %v590, %v586
    %v755 = vpack.c.b16 %v595, %v591
    %v756 = vpack.c.b16 %v596, %v592
    %v757 = vpack.c.b16 %v597, %v593
    %v758 = vpack.c.b16 %v598, %v594
    %v759 = vpack.c.b16 %v603, %v599
    %v760 = vpack.c.b16 %v604, %v600
    %v761 = vpack.c.b16 %v605, %v601
    %v762 = vpack.c.b16 %v606, %v602
    %v763 = vpack.c.b16 %v611, %v607
    %v764 = vpack.c.b16 %v612, %v608
    %v765 = vpack.c.b16 %v613, %v609
    %v766 = vpack.c.b16 %v614, %v610
    %v767 = vpack.c.b16 %v619, %v615
    %v768 = vpack.c.b16 %v620, %v616
    %v769 = vpack.c.b16 %v621, %v617
    %v770 = vpack.c.b16 %v622, %v618
    %v771 = vpack.c.b16 %v627, %v623
    %v772 = vpack.c.b16 %v628, %v624
    %v773 = vpack.c.b16 %v629, %v625
    %v774 = vpack.c.b16 %v630, %v626
    %v775 = vpack.c.b16 %v635, %v631
    %v776 = vpack.c.b16 %v636, %v632
    %v777 = vpack.c.b16 %v637, %v633
    %v778 = vpack.c.b16 %v638, %v634
    %v779 = vpack.c.b16 %v643, %v639
    %v780 = vpack.c.b16 %v644, %v640
    %v781 = vpack.c.b16 %v645, %v641
    %v782 = vpack.c.b16 %v646, %v642
    %v783 = vpack.c.b16 %v651, %v647
    %v784 = vpack.c.b16 %v652, %v648
    %v785 = vpack.c.b16 %v653, %v649
    %v786 = vpack.c.b16 %v654, %v650
    %v787 = vpack.c.b16 %v659, %v655
    %v788 = vpack.c.b16 %v660, %v656
    %v789 = vpack.c.b16 %v661, %v657
    %v790 = vpack.c.b16 %v662, %v658
    %919 = vmatprep.subr.bf16.mxu0 %v692
    %920 = vmatpush1.bf16.msra.mxu0 %v691
    %921 = vmatprep.subr.bf16.mxu0 %v688
    %922 = vmatpush1.bf16.msra.mxu0 %v687
    %923 = vmatprep.subr.bf16.mxu0 %v684
    %924 = vmatpush1.bf16.msra.mxu0 %v683
    %925 = vmatprep.subr.bf16.mxu0 %v680
    %926 = vmatpush1.bf16.msra.mxu0 %v679
    %927 = vmatprep.subr.bf16.mxu0 %v676
    %928 = vmatpush1.bf16.msra.mxu0 %v675
    %929 = vmatprep.subr.bf16.mxu0 %v672
    %930 = vmatpush1.bf16.msra.mxu0 %v671
    %931 = vmatprep.subr.bf16.mxu0 %v668
    %932 = vmatpush1.bf16.msra.mxu0 %v667
    %933 = vmatprep.subr.bf16.mxu0 %v664
    %934 = vmatpush1.bf16.msra.mxu0 %v663
    %935 = vmatprep.subr.bf16.mxu0 %v724
    %936 = vmatpush2.bf16.msra.mxu0 %v723
    %937 = vmatprep.subr.bf16.mxu0 %v720
    %938 = vmatpush2.bf16.msra.mxu0 %v719
    %939 = vmatprep.subr.bf16.mxu0 %v716
    %940 = vmatpush2.bf16.msra.mxu0 %v715
    %941 = vmatprep.subr.bf16.mxu0 %v712
    %942 = vmatpush2.bf16.msra.mxu0 %v711
    %943 = vmatprep.subr.bf16.mxu0 %v708
    %944 = vmatpush2.bf16.msra.mxu0 %v707
    %945 = vmatprep.subr.bf16.mxu0 %v704
    %946 = vmatpush2.bf16.msra.mxu0 %v703
    %947 = vmatprep.subr.bf16.mxu0 %v700
    %948 = vmatpush2.bf16.msra.mxu0 %v699
    %949 = vmatprep.subr.bf16.mxu0 %v696
    %950 = vmatpush2.bf16.msra.mxu0 %v695
    %951 = vmatprep.mubr.bf16.mxu0 %v122
    %952 = vmatmul.mubr.bf16.gmra.mxu0 %v121
    %v953 = vpop.f32.mrf.mxu0
    %v954 = vadd.f32 %v262, %v953
    %v955 = vpop.f32.mrf.mxu0
    %v956 = vadd.f32 %v266, %v955
    %v957 = vpop.f32.mrf.mxu0
    %v958 = vadd.f32 %v262, %v957
    %v959 = vpop.f32.mrf.mxu0
    %v960 = vadd.f32 %v266, %v959
    %961 = vmatprep.mubr.bf16.mxu0 %v126
    %962 = vmatmul.mubr.bf16.gmra.mxu0 %v125
    %v963 = vpop.f32.mrf.mxu0
    %v964 = vadd.f32 %v262, %v963
    %v965 = vpop.f32.mrf.mxu0
    %v966 = vadd.f32 %v266, %v965
    %v967 = vpop.f32.mrf.mxu0
    %v968 = vadd.f32 %v262, %v967
    %v969 = vpop.f32.mrf.mxu0
    %v970 = vadd.f32 %v266, %v969
    %971 = vdwg.mxu0
    %972 = vmatprep.subr.bf16.mxu0 %v756
    %973 = vmatpush1.bf16.msra.mxu0 %v755
    %974 = vmatprep.subr.bf16.mxu0 %v752
    %975 = vmatpush1.bf16.msra.mxu0 %v751
    %976 = vmatprep.subr.bf16.mxu0 %v748
    %977 = vmatpush1.bf16.msra.mxu0 %v747
    %978 = vmatprep.subr.bf16.mxu0 %v744
    %979 = vmatpush1.bf16.msra.mxu0 %v743
    %980 = vmatprep.subr.bf16.mxu0 %v740
    %981 = vmatpush1.bf16.msra.mxu0 %v739
    %982 = vmatprep.subr.bf16.mxu0 %v736
    %983 = vmatpush1.bf16.msra.mxu0 %v735
    %984 = vmatprep.subr.bf16.mxu0 %v732
    %985 = vmatpush1.bf16.msra.mxu0 %v731
    %986 = vmatprep.subr.bf16.mxu0 %v728
    %987 = vmatpush1.bf16.msra.mxu0 %v727
    %988 = vmatprep.subr.bf16.mxu0 %v788
    %989 = vmatpush2.bf16.msra.mxu0 %v787
    %990 = vmatprep.subr.bf16.mxu0 %v784
    %991 = vmatpush2.bf16.msra.mxu0 %v783
    %992 = vmatprep.subr.bf16.mxu0 %v780
    %993 = vmatpush2.bf16.msra.mxu0 %v779
    %994 = vmatprep.subr.bf16.mxu0 %v776
    %995 = vmatpush2.bf16.msra.mxu0 %v775
    %996 = vmatprep.subr.bf16.mxu0 %v772
    %997 = vmatpush2.bf16.msra.mxu0 %v771
    %998 = vmatprep.subr.bf16.mxu0 %v768
    %999 = vmatpush2.bf16.msra.mxu0 %v767
    %1000 = vmatprep.subr.bf16.mxu0 %v764
    %1001 = vmatpush2.bf16.msra.mxu0 %v763
    %1002 = vmatprep.subr.bf16.mxu0 %v760
    %1003 = vmatpush2.bf16.msra.mxu0 %v759
    %1004 = vmatprep.mubr.bf16.mxu0 %v124
    %1005 = vmatmul.mubr.bf16.gmra.mxu0 %v123
    %v1006 = vpop.f32.mrf.mxu0
    %v1007 = vadd.f32 %v954, %v1006
    %v1008 = vpop.f32.mrf.mxu0
    %v1009 = vadd.f32 %v956, %v1008
    %v1010 = vpop.f32.mrf.mxu0
    %v1011 = vadd.f32 %v958, %v1010
    %v1012 = vpop.f32.mrf.mxu0
    %v1013 = vadd.f32 %v960, %v1012
    %1014 = vmatprep.mubr.bf16.mxu0 %v128
    %1015 = vmatmul.mubr.bf16.gmra.mxu0 %v127
    %v1016 = vpop.f32.mrf.mxu0
    %v1017 = vadd.f32 %v964, %v1016
    %v1018 = vpop.f32.mrf.mxu0
    %v1019 = vadd.f32 %v966, %v1018
    %v1020 = vpop.f32.mrf.mxu0
    %v1021 = vadd.f32 %v968, %v1020
    %v1022 = vpop.f32.mrf.mxu0
    %v1023 = vadd.f32 %v970, %v1022
    %1024 = vdwg.mxu0
    %1025 = vmatprep.subr.bf16.mxu0 %v694
    %1026 = vmatpush1.bf16.msra.mxu0 %v693
    %1027 = vmatprep.subr.bf16.mxu0 %v690
    %1028 = vmatpush1.bf16.msra.mxu0 %v689
    %1029 = vmatprep.subr.bf16.mxu0 %v686
    %1030 = vmatpush1.bf16.msra.mxu0 %v685
    %1031 = vmatprep.subr.bf16.mxu0 %v682
    %1032 = vmatpush1.bf16.msra.mxu0 %v681
    %1033 = vmatprep.subr.bf16.mxu0 %v678
    %1034 = vmatpush1.bf16.msra.mxu0 %v677
    %1035 = vmatprep.subr.bf16.mxu0 %v674
    %1036 = vmatpush1.bf16.msra.mxu0 %v673
    %1037 = vmatprep.subr.bf16.mxu0 %v670
    %1038 = vmatpush1.bf16.msra.mxu0 %v669
    %1039 = vmatprep.subr.bf16.mxu0 %v666
    %1040 = vmatpush1.bf16.msra.mxu0 %v665
    %1041 = vmatprep.subr.bf16.mxu0 %v726
    %1042 = vmatpush2.bf16.msra.mxu0 %v725
    %1043 = vmatprep.subr.bf16.mxu0 %v722
    %1044 = vmatpush2.bf16.msra.mxu0 %v721
    %1045 = vmatprep.subr.bf16.mxu0 %v718
    %1046 = vmatpush2.bf16.msra.mxu0 %v717
    %1047 = vmatprep.subr.bf16.mxu0 %v714
    %1048 = vmatpush2.bf16.msra.mxu0 %v713
    %1049 = vmatprep.subr.bf16.mxu0 %v710
    %1050 = vmatpush2.bf16.msra.mxu0 %v709
    %1051 = vmatprep.subr.bf16.mxu0 %v706
    %1052 = vmatpush2.bf16.msra.mxu0 %v705
    %1053 = vmatprep.subr.bf16.mxu0 %v702
    %1054 = vmatpush2.bf16.msra.mxu0 %v701
    %1055 = vmatprep.subr.bf16.mxu0 %v698
    %1056 = vmatpush2.bf16.msra.mxu0 %v697
    %1057 = vmatprep.mubr.bf16.mxu0 %v122
    %1058 = vmatmul.mubr.bf16.gmra.mxu0 %v121
    %v1059 = vpop.f32.mrf.mxu0
    %v1060 = vadd.f32 %v270, %v1059
    %v1061 = vpop.f32.mrf.mxu0
    %v1062 = vadd.f32 %v274, %v1061
    %v1063 = vpop.f32.mrf.mxu0
    %v1064 = vadd.f32 %v270, %v1063
    %v1065 = vpop.f32.mrf.mxu0
    %v1066 = vadd.f32 %v274, %v1065
    %1067 = vmatprep.mubr.bf16.mxu0 %v126
    %1068 = vmatmul.mubr.bf16.gmra.mxu0 %v125
    %v1069 = vpop.f32.mrf.mxu0
    %v1070 = vadd.f32 %v270, %v1069
    %v1071 = vpop.f32.mrf.mxu0
    %v1072 = vadd.f32 %v274, %v1071
    %v1073 = vpop.f32.mrf.mxu0
    %v1074 = vadd.f32 %v270, %v1073
    %v1075 = vpop.f32.mrf.mxu0
    %v1076 = vadd.f32 %v274, %v1075
    %1077 = vdwg.mxu0
    %1078 = vmatprep.subr.bf16.mxu0 %v758
    %1079 = vmatpush1.bf16.msra.mxu0 %v757
    %1080 = vmatprep.subr.bf16.mxu0 %v754
    %1081 = vmatpush1.bf16.msra.mxu0 %v753
    %1082 = vmatprep.subr.bf16.mxu0 %v750
    %1083 = vmatpush1.bf16.msra.mxu0 %v749
    %1084 = vmatprep.subr.bf16.mxu0 %v746
    %1085 = vmatpush1.bf16.msra.mxu0 %v745
    %1086 = vmatprep.subr.bf16.mxu0 %v742
    %1087 = vmatpush1.bf16.msra.mxu0 %v741
    %1088 = vmatprep.subr.bf16.mxu0 %v738
    %1089 = vmatpush1.bf16.msra.mxu0 %v737
    %1090 = vmatprep.subr.bf16.mxu0 %v734
    %1091 = vmatpush1.bf16.msra.mxu0 %v733
    %1092 = vmatprep.subr.bf16.mxu0 %v730
    %1093 = vmatpush1.bf16.msra.mxu0 %v729
    %1094 = vmatprep.subr.bf16.mxu0 %v790
    %1095 = vmatpush2.bf16.msra.mxu0 %v789
    %1096 = vmatprep.subr.bf16.mxu0 %v786
    %1097 = vmatpush2.bf16.msra.mxu0 %v785
    %1098 = vmatprep.subr.bf16.mxu0 %v782
    %1099 = vmatpush2.bf16.msra.mxu0 %v781
    %1100 = vmatprep.subr.bf16.mxu0 %v778
    %1101 = vmatpush2.bf16.msra.mxu0 %v777
    %1102 = vmatprep.subr.bf16.mxu0 %v774
    %1103 = vmatpush2.bf16.msra.mxu0 %v773
    %1104 = vmatprep.subr.bf16.mxu0 %v770
    %1105 = vmatpush2.bf16.msra.mxu0 %v769
    %1106 = vmatprep.subr.bf16.mxu0 %v766
    %1107 = vmatpush2.bf16.msra.mxu0 %v765
    %1108 = vmatprep.subr.bf16.mxu0 %v762
    %1109 = vmatpush2.bf16.msra.mxu0 %v761
    %1110 = vmatprep.mubr.bf16.mxu0 %v124
    %1111 = vmatmul.mubr.bf16.gmra.mxu0 %v123
    %v1112 = vpop.f32.mrf.mxu0
    %v1113 = vadd.f32 %v1060, %v1112
    %v1114 = vpop.f32.mrf.mxu0
    %v1115 = vadd.f32 %v1062, %v1114
    %v1116 = vpop.f32.mrf.mxu0
    %v1117 = vadd.f32 %v1064, %v1116
    %v1118 = vpop.f32.mrf.mxu0
    %v1119 = vadd.f32 %v1066, %v1118
    %1120 = vmatprep.mubr.bf16.mxu0 %v128
    %1121 = vmatmul.mubr.bf16.gmra.mxu0 %v127
    %v1122 = vpop.f32.mrf.mxu0
    %v1123 = vadd.f32 %v1070, %v1122
    %v1124 = vpop.f32.mrf.mxu0
    %v1125 = vadd.f32 %v1072, %v1124
    %v1126 = vpop.f32.mrf.mxu0
    %v1127 = vadd.f32 %v1074, %v1126
    %v1128 = vpop.f32.mrf.mxu0
    %v1129 = vadd.f32 %v1076, %v1128
    %1130 = vdwg.mxu0
    %v1131 = vmax.f32 %v1007, 0.0
    %v1132 = vmax.f32 %v1009, 0.0
    %v1133 = vmax.f32 %v1113, 0.0
    %v1134 = vmax.f32 %v1115, 0.0
    %v1135 = vmax.f32 %v1011, 0.0
    %v1136 = vmax.f32 %v1013, 0.0
    %v1137 = vmax.f32 %v1117, 0.0
    %v1138 = vmax.f32 %v1119, 0.0
    %v1139 = vmax.f32 %v1017, 0.0
    %v1140 = vmax.f32 %v1019, 0.0
    %v1141 = vmax.f32 %v1123, 0.0
    %v1142 = vmax.f32 %v1125, 0.0
    %v1143 = vmax.f32 %v1021, 0.0
    %v1144 = vmax.f32 %v1023, 0.0
    %v1145 = vmax.f32 %v1127, 0.0
    %v1146 = vmax.f32 %v1129, 0.0
    %v1147 = vpack.c.bf16 %v1135, %v1131
    %v1148 = vpack.c.bf16 %v1136, %v1132
    %v1149 = vpack.c.bf16 %v1137, %v1133
    %v1150 = vpack.c.bf16 %v1138, %v1134
    %v1151 = vpack.c.bf16 %v1143, %v1139
    %v1152 = vpack.c.bf16 %v1144, %v1140
    %v1153 = vpack.c.bf16 %v1145, %v1141
    %v1154 = vpack.c.bf16 %v1146, %v1142
    %v1155 = vld [vmem:[#allocation7] sm:$0xff]
    %v1156 = vld [vmem:[#allocation7 + $0x8] sm:$0xff]
    %v1157 = vld [vmem:[#allocation7 + $0x10] sm:$0xff]
    %v1158 = vld [vmem:[#allocation7 + $0x18] sm:$0xff]
    %v1159 = vld [vmem:[#allocation7 + $0x20] sm:$0xff]
    %v1160 = vld [vmem:[#allocation7 + $0x28] sm:$0xff]
    %v1161 = vld [vmem:[#allocation7 + $0x30] sm:$0xff]
    %v1162 = vld [vmem:[#allocation7 + $0x38] sm:$0xff]
    %v1163 = vld [vmem:[#allocation7 + $0x40] sm:$0xff]
    %v1164 = vld [vmem:[#allocation7 + $0x48] sm:$0xff]
    %v1165 = vld [vmem:[#allocation7 + $0x50] sm:$0xff]
    %v1166 = vld [vmem:[#allocation7 + $0x58] sm:$0xff]
    %v1167 = vld [vmem:[#allocation7 + $0x60] sm:$0xff]
    %v1168 = vld [vmem:[#allocation7 + $0x68] sm:$0xff]
    %v1169 = vld [vmem:[#allocation7 + $0x70] sm:$0xff]
    %v1170 = vld [vmem:[#allocation7 + $0x78] sm:$0xff]
    %v1171 = vld [vmem:[#allocation7 + $0x80] sm:$0xff]
    %v1172 = vld [vmem:[#allocation7 + $0x88] sm:$0xff]
    %v1173 = vld [vmem:[#allocation7 + $0x90] sm:$0xff]
    %v1174 = vld [vmem:[#allocation7 + $0x98] sm:$0xff]
    %v1175 = vld [vmem:[#allocation7 + $0xa0] sm:$0xff]
    %v1176 = vld [vmem:[#allocation7 + $0xa8] sm:$0xff]
    %v1177 = vld [vmem:[#allocation7 + $0xb0] sm:$0xff]
    %v1178 = vld [vmem:[#allocation7 + $0xb8] sm:$0xff]
    %v1179 = vld [vmem:[#allocation7 + $0xc0] sm:$0xff]
    %v1180 = vld [vmem:[#allocation7 + $0xc8] sm:$0xff]
    %v1181 = vld [vmem:[#allocation7 + $0xd0] sm:$0xff]
    %v1182 = vld [vmem:[#allocation7 + $0xd8] sm:$0xff]
    %v1183 = vld [vmem:[#allocation7 + $0xe0] sm:$0xff]
    %v1184 = vld [vmem:[#allocation7 + $0xe8] sm:$0xff]
    %v1185 = vld [vmem:[#allocation7 + $0xf0] sm:$0xff]
    %v1186 = vld [vmem:[#allocation7 + $0xf8] sm:$0xff]
    %v1187 = vld [vmem:[#allocation7 + $0x100] sm:$0xff]
    %v1188 = vld [vmem:[#allocation7 + $0x108] sm:$0xff]
    %v1189 = vld [vmem:[#allocation7 + $0x110] sm:$0xff]
    %v1190 = vld [vmem:[#allocation7 + $0x118] sm:$0xff]
    %v1191 = vld [vmem:[#allocation7 + $0x120] sm:$0xff]
    %v1192 = vld [vmem:[#allocation7 + $0x128] sm:$0xff]
    %v1193 = vld [vmem:[#allocation7 + $0x130] sm:$0xff]
    %v1194 = vld [vmem:[#allocation7 + $0x138] sm:$0xff]
    %v1195 = vld [vmem:[#allocation7 + $0x140] sm:$0xff]
    %v1196 = vld [vmem:[#allocation7 + $0x148] sm:$0xff]
    %v1197 = vld [vmem:[#allocation7 + $0x150] sm:$0xff]
    %v1198 = vld [vmem:[#allocation7 + $0x158] sm:$0xff]
    %v1199 = vld [vmem:[#allocation7 + $0x160] sm:$0xff]
    %v1200 = vld [vmem:[#allocation7 + $0x168] sm:$0xff]
    %v1201 = vld [vmem:[#allocation7 + $0x170] sm:$0xff]
    %v1202 = vld [vmem:[#allocation7 + $0x178] sm:$0xff]
    %v1203 = vld [vmem:[#allocation7 + $0x180] sm:$0xff]
    %v1204 = vld [vmem:[#allocation7 + $0x188] sm:$0xff]
    %v1205 = vld [vmem:[#allocation7 + $0x190] sm:$0xff]
    %v1206 = vld [vmem:[#allocation7 + $0x198] sm:$0xff]
    %v1207 = vld [vmem:[#allocation7 + $0x1a0] sm:$0xff]
    %v1208 = vld [vmem:[#allocation7 + $0x1a8] sm:$0xff]
    %v1209 = vld [vmem:[#allocation7 + $0x1b0] sm:$0xff]
    %v1210 = vld [vmem:[#allocation7 + $0x1b8] sm:$0xff]
    %v1211 = vld [vmem:[#allocation7 + $0x1c0] sm:$0xff]
    %v1212 = vld [vmem:[#allocation7 + $0x1c8] sm:$0xff]
    %v1213 = vld [vmem:[#allocation7 + $0x1d0] sm:$0xff]
    %v1214 = vld [vmem:[#allocation7 + $0x1d8] sm:$0xff]
    %v1215 = vld [vmem:[#allocation7 + $0x1e0] sm:$0xff]
    %v1216 = vld [vmem:[#allocation7 + $0x1e8] sm:$0xff]
    %v1217 = vld [vmem:[#allocation7 + $0x1f0] sm:$0xff]
    %v1218 = vld [vmem:[#allocation7 + $0x1f8] sm:$0xff]
    %v1219 = vld [vmem:[#allocation7 + $0x200] sm:$0xff]
    %v1220 = vld [vmem:[#allocation7 + $0x208] sm:$0xff]
    %v1221 = vld [vmem:[#allocation7 + $0x210] sm:$0xff]
    %v1222 = vld [vmem:[#allocation7 + $0x218] sm:$0xff]
    %v1223 = vld [vmem:[#allocation7 + $0x220] sm:$0xff]
    %v1224 = vld [vmem:[#allocation7 + $0x228] sm:$0xff]
    %v1225 = vld [vmem:[#allocation7 + $0x230] sm:$0xff]
    %v1226 = vld [vmem:[#allocation7 + $0x238] sm:$0xff]
    %v1227 = vld [vmem:[#allocation7 + $0x240] sm:$0xff]
    %v1228 = vld [vmem:[#allocation7 + $0x248] sm:$0xff]
    %v1229 = vld [vmem:[#allocation7 + $0x250] sm:$0xff]
    %v1230 = vld [vmem:[#allocation7 + $0x258] sm:$0xff]
    %v1231 = vld [vmem:[#allocation7 + $0x260] sm:$0xff]
    %v1232 = vld [vmem:[#allocation7 + $0x268] sm:$0xff]
    %v1233 = vld [vmem:[#allocation7 + $0x270] sm:$0xff]
    %v1234 = vld [vmem:[#allocation7 + $0x278] sm:$0xff]
    %v1235 = vld [vmem:[#allocation7 + $0x280] sm:$0xff]
    %v1236 = vld [vmem:[#allocation7 + $0x288] sm:$0xff]
    %v1237 = vld [vmem:[#allocation7 + $0x290] sm:$0xff]
    %v1238 = vld [vmem:[#allocation7 + $0x298] sm:$0xff]
    %v1239 = vld [vmem:[#allocation7 + $0x2a0] sm:$0xff]
    %v1240 = vld [vmem:[#allocation7 + $0x2a8] sm:$0xff]
    %v1241 = vld [vmem:[#allocation7 + $0x2b0] sm:$0xff]
    %v1242 = vld [vmem:[#allocation7 + $0x2b8] sm:$0xff]
    %v1243 = vld [vmem:[#allocation7 + $0x2c0] sm:$0xff]
    %v1244 = vld [vmem:[#allocation7 + $0x2c8] sm:$0xff]
    %v1245 = vld [vmem:[#allocation7 + $0x2d0] sm:$0xff]
    %v1246 = vld [vmem:[#allocation7 + $0x2d8] sm:$0xff]
    %v1247 = vld [vmem:[#allocation7 + $0x2e0] sm:$0xff]
    %v1248 = vld [vmem:[#allocation7 + $0x2e8] sm:$0xff]
    %v1249 = vld [vmem:[#allocation7 + $0x2f0] sm:$0xff]
    %v1250 = vld [vmem:[#allocation7 + $0x2f8] sm:$0xff]
    %v1251 = vld [vmem:[#allocation7 + $0x300] sm:$0xff]
    %v1252 = vld [vmem:[#allocation7 + $0x308] sm:$0xff]
    %v1253 = vld [vmem:[#allocation7 + $0x310] sm:$0xff]
    %v1254 = vld [vmem:[#allocation7 + $0x318] sm:$0xff]
    %v1255 = vld [vmem:[#allocation7 + $0x320] sm:$0xff]
    %v1256 = vld [vmem:[#allocation7 + $0x328] sm:$0xff]
    %v1257 = vld [vmem:[#allocation7 + $0x330] sm:$0xff]
    %v1258 = vld [vmem:[#allocation7 + $0x338] sm:$0xff]
    %v1259 = vld [vmem:[#allocation7 + $0x340] sm:$0xff]
    %v1260 = vld [vmem:[#allocation7 + $0x348] sm:$0xff]
    %v1261 = vld [vmem:[#allocation7 + $0x350] sm:$0xff]
    %v1262 = vld [vmem:[#allocation7 + $0x358] sm:$0xff]
    %v1263 = vld [vmem:[#allocation7 + $0x360] sm:$0xff]
    %v1264 = vld [vmem:[#allocation7 + $0x368] sm:$0xff]
    %v1265 = vld [vmem:[#allocation7 + $0x370] sm:$0xff]
    %v1266 = vld [vmem:[#allocation7 + $0x378] sm:$0xff]
    %v1267 = vld [vmem:[#allocation7 + $0x380] sm:$0xff]
    %v1268 = vld [vmem:[#allocation7 + $0x388] sm:$0xff]
    %v1269 = vld [vmem:[#allocation7 + $0x390] sm:$0xff]
    %v1270 = vld [vmem:[#allocation7 + $0x398] sm:$0xff]
    %v1271 = vld [vmem:[#allocation7 + $0x3a0] sm:$0xff]
    %v1272 = vld [vmem:[#allocation7 + $0x3a8] sm:$0xff]
    %v1273 = vld [vmem:[#allocation7 + $0x3b0] sm:$0xff]
    %v1274 = vld [vmem:[#allocation7 + $0x3b8] sm:$0xff]
    %v1275 = vld [vmem:[#allocation7 + $0x3c0] sm:$0xff]
    %v1276 = vld [vmem:[#allocation7 + $0x3c8] sm:$0xff]
    %v1277 = vld [vmem:[#allocation7 + $0x3d0] sm:$0xff]
    %v1278 = vld [vmem:[#allocation7 + $0x3d8] sm:$0xff]
    %v1279 = vld [vmem:[#allocation7 + $0x3e0] sm:$0xff]
    %v1280 = vld [vmem:[#allocation7 + $0x3e8] sm:$0xff]
    %v1281 = vld [vmem:[#allocation7 + $0x3f0] sm:$0xff]
    %v1282 = vld [vmem:[#allocation7 + $0x3f8] sm:$0xff]
    %v1283 = vld [vmem:[#allocation9] sm:$0xf]
    %v1285 = vlaneseq
    %v1286 = vshrl.u32 %v1285, 7
    %v1287 = vsub.s32 0, %v1286
    %v1288 = vrot.slane %v1283, %v1287
    %v1289 = vlaneseq
    %v1290 = vshrl.u32 %v1289, 7
    %v1291 = vsub.s32 1, %v1290
    %v1292 = vrot.slane %v1283, %v1291
    %v1293 = vlaneseq
    %v1294 = vshrl.u32 %v1293, 7
    %v1295 = vsub.s32 2, %v1294
    %v1296 = vrot.slane %v1283, %v1295
    %v1297 = vlaneseq
    %v1298 = vshrl.u32 %v1297, 7
    %v1299 = vsub.s32 3, %v1298
    %v1300 = vrot.slane %v1283, %v1299
    %v1433 = vunpack.c.l.b16 %v1155
    %v1434 = vunpack.c.h.b16 %v1155
    %v1435 = vunpack.c.l.b16 %v1156
    %v1436 = vunpack.c.h.b16 %v1156
    %v1437 = vunpack.c.l.b16 %v1157
    %v1438 = vunpack.c.h.b16 %v1157
    %v1439 = vunpack.c.l.b16 %v1158
    %v1440 = vunpack.c.h.b16 %v1158
    %v1441 = vunpack.c.l.b16 %v1159
    %v1442 = vunpack.c.h.b16 %v1159
    %v1443 = vunpack.c.l.b16 %v1160
    %v1444 = vunpack.c.h.b16 %v1160
    %v1445 = vunpack.c.l.b16 %v1161
    %v1446 = vunpack.c.h.b16 %v1161
    %v1447 = vunpack.c.l.b16 %v1162
    %v1448 = vunpack.c.h.b16 %v1162
    %v1449 = vunpack.c.l.b16 %v1163
    %v1450 = vunpack.c.h.b16 %v1163
    %v1451 = vunpack.c.l.b16 %v1164
    %v1452 = vunpack.c.h.b16 %v1164
    %v1453 = vunpack.c.l.b16 %v1165
    %v1454 = vunpack.c.h.b16 %v1165
    %v1455 = vunpack.c.l.b16 %v1166
    %v1456 = vunpack.c.h.b16 %v1166
    %v1457 = vunpack.c.l.b16 %v1167
    %v1458 = vunpack.c.h.b16 %v1167
    %v1459 = vunpack.c.l.b16 %v1168
    %v1460 = vunpack.c.h.b16 %v1168
    %v1461 = vunpack.c.l.b16 %v1169
    %v1462 = vunpack.c.h.b16 %v1169
    %v1463 = vunpack.c.l.b16 %v1170
    %v1464 = vunpack.c.h.b16 %v1170
    %v1465 = vunpack.c.l.b16 %v1171
    %v1466 = vunpack.c.h.b16 %v1171
    %v1467 = vunpack.c.l.b16 %v1172
    %v1468 = vunpack.c.h.b16 %v1172
    %v1469 = vunpack.c.l.b16 %v1173
    %v1470 = vunpack.c.h.b16 %v1173
    %v1471 = vunpack.c.l.b16 %v1174
    %v1472 = vunpack.c.h.b16 %v1174
    %v1473 = vunpack.c.l.b16 %v1175
    %v1474 = vunpack.c.h.b16 %v1175
    %v1475 = vunpack.c.l.b16 %v1176
    %v1476 = vunpack.c.h.b16 %v1176
    %v1477 = vunpack.c.l.b16 %v1177
    %v1478 = vunpack.c.h.b16 %v1177
    %v1479 = vunpack.c.l.b16 %v1178
    %v1480 = vunpack.c.h.b16 %v1178
    %v1481 = vunpack.c.l.b16 %v1179
    %v1482 = vunpack.c.h.b16 %v1179
    %v1483 = vunpack.c.l.b16 %v1180
    %v1484 = vunpack.c.h.b16 %v1180
    %v1485 = vunpack.c.l.b16 %v1181
    %v1486 = vunpack.c.h.b16 %v1181
    %v1487 = vunpack.c.l.b16 %v1182
    %v1488 = vunpack.c.h.b16 %v1182
    %v1489 = vunpack.c.l.b16 %v1183
    %v1490 = vunpack.c.h.b16 %v1183
    %v1491 = vunpack.c.l.b16 %v1184
    %v1492 = vunpack.c.h.b16 %v1184
    %v1493 = vunpack.c.l.b16 %v1185
    %v1494 = vunpack.c.h.b16 %v1185
    %v1495 = vunpack.c.l.b16 %v1186
    %v1496 = vunpack.c.h.b16 %v1186
    %v1497 = vunpack.c.l.b16 %v1187
    %v1498 = vunpack.c.h.b16 %v1187
    %v1499 = vunpack.c.l.b16 %v1188
    %v1500 = vunpack.c.h.b16 %v1188
    %v1501 = vunpack.c.l.b16 %v1189
    %v1502 = vunpack.c.h.b16 %v1189
    %v1503 = vunpack.c.l.b16 %v1190
    %v1504 = vunpack.c.h.b16 %v1190
    %v1505 = vunpack.c.l.b16 %v1191
    %v1506 = vunpack.c.h.b16 %v1191
    %v1507 = vunpack.c.l.b16 %v1192
    %v1508 = vunpack.c.h.b16 %v1192
    %v1509 = vunpack.c.l.b16 %v1193
    %v1510 = vunpack.c.h.b16 %v1193
    %v1511 = vunpack.c.l.b16 %v1194
    %v1512 = vunpack.c.h.b16 %v1194
    %v1513 = vunpack.c.l.b16 %v1195
    %v1514 = vunpack.c.h.b16 %v1195
    %v1515 = vunpack.c.l.b16 %v1196
    %v1516 = vunpack.c.h.b16 %v1196
    %v1517 = vunpack.c.l.b16 %v1197
    %v1518 = vunpack.c.h.b16 %v1197
    %v1519 = vunpack.c.l.b16 %v1198
    %v1520 = vunpack.c.h.b16 %v1198
    %v1521 = vunpack.c.l.b16 %v1199
    %v1522 = vunpack.c.h.b16 %v1199
    %v1523 = vunpack.c.l.b16 %v1200
    %v1524 = vunpack.c.h.b16 %v1200
    %v1525 = vunpack.c.l.b16 %v1201
    %v1526 = vunpack.c.h.b16 %v1201
    %v1527 = vunpack.c.l.b16 %v1202
    %v1528 = vunpack.c.h.b16 %v1202
    %v1529 = vunpack.c.l.b16 %v1203
    %v1530 = vunpack.c.h.b16 %v1203
    %v1531 = vunpack.c.l.b16 %v1204
    %v1532 = vunpack.c.h.b16 %v1204
    %v1533 = vunpack.c.l.b16 %v1205
    %v1534 = vunpack.c.h.b16 %v1205
    %v1535 = vunpack.c.l.b16 %v1206
    %v1536 = vunpack.c.h.b16 %v1206
    %v1537 = vunpack.c.l.b16 %v1207
    %v1538 = vunpack.c.h.b16 %v1207
    %v1539 = vunpack.c.l.b16 %v1208
    %v1540 = vunpack.c.h.b16 %v1208
    %v1541 = vunpack.c.l.b16 %v1209
    %v1542 = vunpack.c.h.b16 %v1209
    %v1543 = vunpack.c.l.b16 %v1210
    %v1544 = vunpack.c.h.b16 %v1210
    %v1545 = vunpack.c.l.b16 %v1211
    %v1546 = vunpack.c.h.b16 %v1211
    %v1547 = vunpack.c.l.b16 %v1212
    %v1548 = vunpack.c.h.b16 %v1212
    %v1549 = vunpack.c.l.b16 %v1213
    %v1550 = vunpack.c.h.b16 %v1213
    %v1551 = vunpack.c.l.b16 %v1214
    %v1552 = vunpack.c.h.b16 %v1214
    %v1553 = vunpack.c.l.b16 %v1215
    %v1554 = vunpack.c.h.b16 %v1215
    %v1555 = vunpack.c.l.b16 %v1216
    %v1556 = vunpack.c.h.b16 %v1216
    %v1557 = vunpack.c.l.b16 %v1217
    %v1558 = vunpack.c.h.b16 %v1217
    %v1559 = vunpack.c.l.b16 %v1218
    %v1560 = vunpack.c.h.b16 %v1218
    %v1561 = vunpack.c.l.b16 %v1219
    %v1562 = vunpack.c.h.b16 %v1219
    %v1563 = vunpack.c.l.b16 %v1220
    %v1564 = vunpack.c.h.b16 %v1220
    %v1565 = vunpack.c.l.b16 %v1221
    %v1566 = vunpack.c.h.b16 %v1221
    %v1567 = vunpack.c.l.b16 %v1222
    %v1568 = vunpack.c.h.b16 %v1222
    %v1569 = vunpack.c.l.b16 %v1223
    %v1570 = vunpack.c.h.b16 %v1223
    %v1571 = vunpack.c.l.b16 %v1224
    %v1572 = vunpack.c.h.b16 %v1224
    %v1573 = vunpack.c.l.b16 %v1225
    %v1574 = vunpack.c.h.b16 %v1225
    %v1575 = vunpack.c.l.b16 %v1226
    %v1576 = vunpack.c.h.b16 %v1226
    %v1577 = vunpack.c.l.b16 %v1227
    %v1578 = vunpack.c.h.b16 %v1227
    %v1579 = vunpack.c.l.b16 %v1228
    %v1580 = vunpack.c.h.b16 %v1228
    %v1581 = vunpack.c.l.b16 %v1229
    %v1582 = vunpack.c.h.b16 %v1229
    %v1583 = vunpack.c.l.b16 %v1230
    %v1584 = vunpack.c.h.b16 %v1230
    %v1585 = vunpack.c.l.b16 %v1231
    %v1586 = vunpack.c.h.b16 %v1231
    %v1587 = vunpack.c.l.b16 %v1232
    %v1588 = vunpack.c.h.b16 %v1232
    %v1589 = vunpack.c.l.b16 %v1233
    %v1590 = vunpack.c.h.b16 %v1233
    %v1591 = vunpack.c.l.b16 %v1234
    %v1592 = vunpack.c.h.b16 %v1234
    %v1593 = vunpack.c.l.b16 %v1235
    %v1594 = vunpack.c.h.b16 %v1235
    %v1595 = vunpack.c.l.b16 %v1236
    %v1596 = vunpack.c.h.b16 %v1236
    %v1597 = vunpack.c.l.b16 %v1237
    %v1598 = vunpack.c.h.b16 %v1237
    %v1599 = vunpack.c.l.b16 %v1238
    %v1600 = vunpack.c.h.b16 %v1238
    %v1601 = vunpack.c.l.b16 %v1239
    %v1602 = vunpack.c.h.b16 %v1239
    %v1603 = vunpack.c.l.b16 %v1240
    %v1604 = vunpack.c.h.b16 %v1240
    %v1605 = vunpack.c.l.b16 %v1241
    %v1606 = vunpack.c.h.b16 %v1241
    %v1607 = vunpack.c.l.b16 %v1242
    %v1608 = vunpack.c.h.b16 %v1242
    %v1609 = vunpack.c.l.b16 %v1243
    %v1610 = vunpack.c.h.b16 %v1243
    %v1611 = vunpack.c.l.b16 %v1244
    %v1612 = vunpack.c.h.b16 %v1244
    %v1613 = vunpack.c.l.b16 %v1245
    %v1614 = vunpack.c.h.b16 %v1245
    %v1615 = vunpack.c.l.b16 %v1246
    %v1616 = vunpack.c.h.b16 %v1246
    %v1617 = vunpack.c.l.b16 %v1247
    %v1618 = vunpack.c.h.b16 %v1247
    %v1619 = vunpack.c.l.b16 %v1248
    %v1620 = vunpack.c.h.b16 %v1248
    %v1621 = vunpack.c.l.b16 %v1249
    %v1622 = vunpack.c.h.b16 %v1249
    %v1623 = vunpack.c.l.b16 %v1250
    %v1624 = vunpack.c.h.b16 %v1250
    %v1625 = vunpack.c.l.b16 %v1251
    %v1626 = vunpack.c.h.b16 %v1251
    %v1627 = vunpack.c.l.b16 %v1252
    %v1628 = vunpack.c.h.b16 %v1252
    %v1629 = vunpack.c.l.b16 %v1253
    %v1630 = vunpack.c.h.b16 %v1253
    %v1631 = vunpack.c.l.b16 %v1254
    %v1632 = vunpack.c.h.b16 %v1254
    %v1633 = vunpack.c.l.b16 %v1255
    %v1634 = vunpack.c.h.b16 %v1255
    %v1635 = vunpack.c.l.b16 %v1256
    %v1636 = vunpack.c.h.b16 %v1256
    %v1637 = vunpack.c.l.b16 %v1257
    %v1638 = vunpack.c.h.b16 %v1257
    %v1639 = vunpack.c.l.b16 %v1258
    %v1640 = vunpack.c.h.b16 %v1258
    %v1641 = vunpack.c.l.b16 %v1259
    %v1642 = vunpack.c.h.b16 %v1259
    %v1643 = vunpack.c.l.b16 %v1260
    %v1644 = vunpack.c.h.b16 %v1260
    %v1645 = vunpack.c.l.b16 %v1261
    %v1646 = vunpack.c.h.b16 %v1261
    %v1647 = vunpack.c.l.b16 %v1262
    %v1648 = vunpack.c.h.b16 %v1262
    %v1649 = vunpack.c.l.b16 %v1263
    %v1650 = vunpack.c.h.b16 %v1263
    %v1651 = vunpack.c.l.b16 %v1264
    %v1652 = vunpack.c.h.b16 %v1264
    %v1653 = vunpack.c.l.b16 %v1265
    %v1654 = vunpack.c.h.b16 %v1265
    %v1655 = vunpack.c.l.b16 %v1266
    %v1656 = vunpack.c.h.b16 %v1266
    %v1657 = vunpack.c.l.b16 %v1267
    %v1658 = vunpack.c.h.b16 %v1267
    %v1659 = vunpack.c.l.b16 %v1268
    %v1660 = vunpack.c.h.b16 %v1268
    %v1661 = vunpack.c.l.b16 %v1269
    %v1662 = vunpack.c.h.b16 %v1269
    %v1663 = vunpack.c.l.b16 %v1270
    %v1664 = vunpack.c.h.b16 %v1270
    %v1665 = vunpack.c.l.b16 %v1271
    %v1666 = vunpack.c.h.b16 %v1271
    %v1667 = vunpack.c.l.b16 %v1272
    %v1668 = vunpack.c.h.b16 %v1272
    %v1669 = vunpack.c.l.b16 %v1273
    %v1670 = vunpack.c.h.b16 %v1273
    %v1671 = vunpack.c.l.b16 %v1274
    %v1672 = vunpack.c.h.b16 %v1274
    %v1673 = vunpack.c.l.b16 %v1275
    %v1674 = vunpack.c.h.b16 %v1275
    %v1675 = vunpack.c.l.b16 %v1276
    %v1676 = vunpack.c.h.b16 %v1276
    %v1677 = vunpack.c.l.b16 %v1277
    %v1678 = vunpack.c.h.b16 %v1277
    %v1679 = vunpack.c.l.b16 %v1278
    %v1680 = vunpack.c.h.b16 %v1278
    %v1681 = vunpack.c.l.b16 %v1279
    %v1682 = vunpack.c.h.b16 %v1279
    %v1683 = vunpack.c.l.b16 %v1280
    %v1684 = vunpack.c.h.b16 %v1280
    %v1685 = vunpack.c.l.b16 %v1281
    %v1686 = vunpack.c.h.b16 %v1281
    %v1687 = vunpack.c.l.b16 %v1282
    %v1688 = vunpack.c.h.b16 %v1282
    %v1689 = vpack.c.b16 %v1437, %v1433
    %v1690 = vpack.c.b16 %v1438, %v1434
    %v1691 = vpack.c.b16 %v1439, %v1435
    %v1692 = vpack.c.b16 %v1440, %v1436
    %v1693 = vpack.c.b16 %v1445, %v1441
    %v1694 = vpack.c.b16 %v1446, %v1442
    %v1695 = vpack.c.b16 %v1447, %v1443
    %v1696 = vpack.c.b16 %v1448, %v1444
    %v1697 = vpack.c.b16 %v1453, %v1449
    %v1698 = vpack.c.b16 %v1454, %v1450
    %v1699 = vpack.c.b16 %v1455, %v1451
    %v1700 = vpack.c.b16 %v1456, %v1452
    %v1701 = vpack.c.b16 %v1461, %v1457
    %v1702 = vpack.c.b16 %v1462, %v1458
    %v1703 = vpack.c.b16 %v1463, %v1459
    %v1704 = vpack.c.b16 %v1464, %v1460
    %v1705 = vpack.c.b16 %v1469, %v1465
    %v1706 = vpack.c.b16 %v1470, %v1466
    %v1707 = vpack.c.b16 %v1471, %v1467
    %v1708 = vpack.c.b16 %v1472, %v1468
    %v1709 = vpack.c.b16 %v1477, %v1473
    %v1710 = vpack.c.b16 %v1478, %v1474
    %v1711 = vpack.c.b16 %v1479, %v1475
    %v1712 = vpack.c.b16 %v1480, %v1476
    %v1713 = vpack.c.b16 %v1485, %v1481
    %v1714 = vpack.c.b16 %v1486, %v1482
    %v1715 = vpack.c.b16 %v1487, %v1483
    %v1716 = vpack.c.b16 %v1488, %v1484
    %v1717 = vpack.c.b16 %v1493, %v1489
    %v1718 = vpack.c.b16 %v1494, %v1490
    %v1719 = vpack.c.b16 %v1495, %v1491
    %v1720 = vpack.c.b16 %v1496, %v1492
    %v1721 = vpack.c.b16 %v1501, %v1497
    %v1722 = vpack.c.b16 %v1502, %v1498
    %v1723 = vpack.c.b16 %v1503, %v1499
    %v1724 = vpack.c.b16 %v1504, %v1500
    %v1725 = vpack.c.b16 %v1509, %v1505
    %v1726 = vpack.c.b16 %v1510, %v1506
    %v1727 = vpack.c.b16 %v1511, %v1507
    %v1728 = vpack.c.b16 %v1512, %v1508
    %v1729 = vpack.c.b16 %v1517, %v1513
    %v1730 = vpack.c.b16 %v1518, %v1514
    %v1731 = vpack.c.b16 %v1519, %v1515
    %v1732 = vpack.c.b16 %v1520, %v1516
    %v1733 = vpack.c.b16 %v1525, %v1521
    %v1734 = vpack.c.b16 %v1526, %v1522
    %v1735 = vpack.c.b16 %v1527, %v1523
    %v1736 = vpack.c.b16 %v1528, %v1524
    %v1737 = vpack.c.b16 %v1533, %v1529
    %v1738 = vpack.c.b16 %v1534, %v1530
    %v1739 = vpack.c.b16 %v1535, %v1531
    %v1740 = vpack.c.b16 %v1536, %v1532
    %v1741 = vpack.c.b16 %v1541, %v1537
    %v1742 = vpack.c.b16 %v1542, %v1538
    %v1743 = vpack.c.b16 %v1543, %v1539
    %v1744 = vpack.c.b16 %v1544, %v1540
    %v1745 = vpack.c.b16 %v1549, %v1545
    %v1746 = vpack.c.b16 %v1550, %v1546
    %v1747 = vpack.c.b16 %v1551, %v1547
    %v1748 = vpack.c.b16 %v1552, %v1548
    %v1749 = vpack.c.b16 %v1557, %v1553
    %v1750 = vpack.c.b16 %v1558, %v1554
    %v1751 = vpack.c.b16 %v1559, %v1555
    %v1752 = vpack.c.b16 %v1560, %v1556
    %v1753 = vpack.c.b16 %v1565, %v1561
    %v1754 = vpack.c.b16 %v1566, %v1562
    %v1755 = vpack.c.b16 %v1567, %v1563
    %v1756 = vpack.c.b16 %v1568, %v1564
    %v1757 = vpack.c.b16 %v1573, %v1569
    %v1758 = vpack.c.b16 %v1574, %v1570
    %v1759 = vpack.c.b16 %v1575, %v1571
    %v1760 = vpack.c.b16 %v1576, %v1572
    %v1761 = vpack.c.b16 %v1581, %v1577
    %v1762 = vpack.c.b16 %v1582, %v1578
    %v1763 = vpack.c.b16 %v1583, %v1579
    %v1764 = vpack.c.b16 %v1584, %v1580
    %v1765 = vpack.c.b16 %v1589, %v1585
    %v1766 = vpack.c.b16 %v1590, %v1586
    %v1767 = vpack.c.b16 %v1591, %v1587
    %v1768 = vpack.c.b16 %v1592, %v1588
    %v1769 = vpack.c.b16 %v1597, %v1593
    %v1770 = vpack.c.b16 %v1598, %v1594
    %v1771 = vpack.c.b16 %v1599, %v1595
    %v1772 = vpack.c.b16 %v1600, %v1596
    %v1773 = vpack.c.b16 %v1605, %v1601
    %v1774 = vpack.c.b16 %v1606, %v1602
    %v1775 = vpack.c.b16 %v1607, %v1603
    %v1776 = vpack.c.b16 %v1608, %v1604
    %v1777 = vpack.c.b16 %v1613, %v1609
    %v1778 = vpack.c.b16 %v1614, %v1610
    %v1779 = vpack.c.b16 %v1615, %v1611
    %v1780 = vpack.c.b16 %v1616, %v1612
    %v1781 = vpack.c.b16 %v1621, %v1617
    %v1782 = vpack.c.b16 %v1622, %v1618
    %v1783 = vpack.c.b16 %v1623, %v1619
    %v1784 = vpack.c.b16 %v1624, %v1620
    %v1785 = vpack.c.b16 %v1629, %v1625
    %v1786 = vpack.c.b16 %v1630, %v1626
    %v1787 = vpack.c.b16 %v1631, %v1627
    %v1788 = vpack.c.b16 %v1632, %v1628
    %v1789 = vpack.c.b16 %v1637, %v1633
    %v1790 = vpack.c.b16 %v1638, %v1634
    %v1791 = vpack.c.b16 %v1639, %v1635
    %v1792 = vpack.c.b16 %v1640, %v1636
    %v1793 = vpack.c.b16 %v1645, %v1641
    %v1794 = vpack.c.b16 %v1646, %v1642
    %v1795 = vpack.c.b16 %v1647, %v1643
    %v1796 = vpack.c.b16 %v1648, %v1644
    %v1797 = vpack.c.b16 %v1653, %v1649
    %v1798 = vpack.c.b16 %v1654, %v1650
    %v1799 = vpack.c.b16 %v1655, %v1651
    %v1800 = vpack.c.b16 %v1656, %v1652
    %v1801 = vpack.c.b16 %v1661, %v1657
    %v1802 = vpack.c.b16 %v1662, %v1658
    %v1803 = vpack.c.b16 %v1663, %v1659
    %v1804 = vpack.c.b16 %v1664, %v1660
    %v1805 = vpack.c.b16 %v1669, %v1665
    %v1806 = vpack.c.b16 %v1670, %v1666
    %v1807 = vpack.c.b16 %v1671, %v1667
    %v1808 = vpack.c.b16 %v1672, %v1668
    %v1809 = vpack.c.b16 %v1677, %v1673
    %v1810 = vpack.c.b16 %v1678, %v1674
    %v1811 = vpack.c.b16 %v1679, %v1675
    %v1812 = vpack.c.b16 %v1680, %v1676
    %v1813 = vpack.c.b16 %v1685, %v1681
    %v1814 = vpack.c.b16 %v1686, %v1682
    %v1815 = vpack.c.b16 %v1687, %v1683
    %v1816 = vpack.c.b16 %v1688, %v1684
    %1945 = vmatprep.subr.bf16.mxu0 %v1718
    %1946 = vmatpush1.bf16.msra.mxu0 %v1717
    %1947 = vmatprep.subr.bf16.mxu0 %v1714
    %1948 = vmatpush1.bf16.msra.mxu0 %v1713
    %1949 = vmatprep.subr.bf16.mxu0 %v1710
    %1950 = vmatpush1.bf16.msra.mxu0 %v1709
    %1951 = vmatprep.subr.bf16.mxu0 %v1706
    %1952 = vmatpush1.bf16.msra.mxu0 %v1705
    %1953 = vmatprep.subr.bf16.mxu0 %v1702
    %1954 = vmatpush1.bf16.msra.mxu0 %v1701
    %1955 = vmatprep.subr.bf16.mxu0 %v1698
    %1956 = vmatpush1.bf16.msra.mxu0 %v1697
    %1957 = vmatprep.subr.bf16.mxu0 %v1694
    %1958 = vmatpush1.bf16.msra.mxu0 %v1693
    %1959 = vmatprep.subr.bf16.mxu0 %v1690
    %1960 = vmatpush1.bf16.msra.mxu0 %v1689
    %1961 = vmatprep.subr.bf16.mxu0 %v1750
    %1962 = vmatpush2.bf16.msra.mxu0 %v1749
    %1963 = vmatprep.subr.bf16.mxu0 %v1746
    %1964 = vmatpush2.bf16.msra.mxu0 %v1745
    %1965 = vmatprep.subr.bf16.mxu0 %v1742
    %1966 = vmatpush2.bf16.msra.mxu0 %v1741
    %1967 = vmatprep.subr.bf16.mxu0 %v1738
    %1968 = vmatpush2.bf16.msra.mxu0 %v1737
    %1969 = vmatprep.subr.bf16.mxu0 %v1734
    %1970 = vmatpush2.bf16.msra.mxu0 %v1733
    %1971 = vmatprep.subr.bf16.mxu0 %v1730
    %1972 = vmatpush2.bf16.msra.mxu0 %v1729
    %1973 = vmatprep.subr.bf16.mxu0 %v1726
    %1974 = vmatpush2.bf16.msra.mxu0 %v1725
    %1975 = vmatprep.subr.bf16.mxu0 %v1722
    %1976 = vmatpush2.bf16.msra.mxu0 %v1721
    %1977 = vmatprep.mubr.bf16.mxu0 %v1148
    %1978 = vmatmul.mubr.bf16.gmra.mxu0 %v1147
    %v1979 = vpop.f32.mrf.mxu0
    %v1980 = vadd.f32 %v1288, %v1979
    %v1981 = vpop.f32.mrf.mxu0
    %v1982 = vadd.f32 %v1292, %v1981
    %v1983 = vpop.f32.mrf.mxu0
    %v1984 = vadd.f32 %v1288, %v1983
    %v1985 = vpop.f32.mrf.mxu0
    %v1986 = vadd.f32 %v1292, %v1985
    %1987 = vmatprep.mubr.bf16.mxu0 %v1152
    %1988 = vmatmul.mubr.bf16.gmra.mxu0 %v1151
    %v1989 = vpop.f32.mrf.mxu0
    %v1990 = vadd.f32 %v1288, %v1989
    %v1991 = vpop.f32.mrf.mxu0
    %v1992 = vadd.f32 %v1292, %v1991
    %v1993 = vpop.f32.mrf.mxu0
    %v1994 = vadd.f32 %v1288, %v1993
    %v1995 = vpop.f32.mrf.mxu0
    %v1996 = vadd.f32 %v1292, %v1995
    %1997 = vdwg.mxu0
    %1998 = vmatprep.subr.bf16.mxu0 %v1782
    %1999 = vmatpush1.bf16.msra.mxu0 %v1781
    %2000 = vmatprep.subr.bf16.mxu0 %v1778
    %2001 = vmatpush1.bf16.msra.mxu0 %v1777
    %2002 = vmatprep.subr.bf16.mxu0 %v1774
    %2003 = vmatpush1.bf16.msra.mxu0 %v1773
    %2004 = vmatprep.subr.bf16.mxu0 %v1770
    %2005 = vmatpush1.bf16.msra.mxu0 %v1769
    %2006 = vmatprep.subr.bf16.mxu0 %v1766
    %2007 = vmatpush1.bf16.msra.mxu0 %v1765
    %2008 = vmatprep.subr.bf16.mxu0 %v1762
    %2009 = vmatpush1.bf16.msra.mxu0 %v1761
    %2010 = vmatprep.subr.bf16.mxu0 %v1758
    %2011 = vmatpush1.bf16.msra.mxu0 %v1757
    %2012 = vmatprep.subr.bf16.mxu0 %v1754
    %2013 = vmatpush1.bf16.msra.mxu0 %v1753
    %2014 = vmatprep.subr.bf16.mxu0 %v1814
    %2015 = vmatpush2.bf16.msra.mxu0 %v1813
    %2016 = vmatprep.subr.bf16.mxu0 %v1810
    %2017 = vmatpush2.bf16.msra.mxu0 %v1809
    %2018 = vmatprep.subr.bf16.mxu0 %v1806
    %2019 = vmatpush2.bf16.msra.mxu0 %v1805
    %2020 = vmatprep.subr.bf16.mxu0 %v1802
    %2021 = vmatpush2.bf16.msra.mxu0 %v1801
    %2022 = vmatprep.subr.bf16.mxu0 %v1798
    %2023 = vmatpush2.bf16.msra.mxu0 %v1797
    %2024 = vmatprep.subr.bf16.mxu0 %v1794
    %2025 = vmatpush2.bf16.msra.mxu0 %v1793
    %2026 = vmatprep.subr.bf16.mxu0 %v1790
    %2027 = vmatpush2.bf16.msra.mxu0 %v1789
    %2028 = vmatprep.subr.bf16.mxu0 %v1786
    %2029 = vmatpush2.bf16.msra.mxu0 %v1785
    %2030 = vmatprep.mubr.bf16.mxu0 %v1150
    %2031 = vmatmul.mubr.bf16.gmra.mxu0 %v1149
    %v2032 = vpop.f32.mrf.mxu0
    %v2033 = vadd.f32 %v1980, %v2032
    %v2034 = vpop.f32.mrf.mxu0
    %v2035 = vadd.f32 %v1982, %v2034
    %v2036 = vpop.f32.mrf.mxu0
    %v2037 = vadd.f32 %v1984, %v2036
    %v2038 = vpop.f32.mrf.mxu0
    %v2039 = vadd.f32 %v1986, %v2038
    %2040 = vmatprep.mubr.bf16.mxu0 %v1154
    %2041 = vmatmul.mubr.bf16.gmra.mxu0 %v1153
    %v2042 = vpop.f32.mrf.mxu0
    %v2043 = vadd.f32 %v1990, %v2042
    %v2044 = vpop.f32.mrf.mxu0
    %v2045 = vadd.f32 %v1992, %v2044
    %v2046 = vpop.f32.mrf.mxu0
    %v2047 = vadd.f32 %v1994, %v2046
    %v2048 = vpop.f32.mrf.mxu0
    %v2049 = vadd.f32 %v1996, %v2048
    %2050 = vdwg.mxu0
    %2051 = vmatprep.subr.bf16.mxu0 %v1720
    %2052 = vmatpush1.bf16.msra.mxu0 %v1719
    %2053 = vmatprep.subr.bf16.mxu0 %v1716
    %2054 = vmatpush1.bf16.msra.mxu0 %v1715
    %2055 = vmatprep.subr.bf16.mxu0 %v1712
    %2056 = vmatpush1.bf16.msra.mxu0 %v1711
    %2057 = vmatprep.subr.bf16.mxu0 %v1708
    %2058 = vmatpush1.bf16.msra.mxu0 %v1707
    %2059 = vmatprep.subr.bf16.mxu0 %v1704
    %2060 = vmatpush1.bf16.msra.mxu0 %v1703
    %2061 = vmatprep.subr.bf16.mxu0 %v1700
    %2062 = vmatpush1.bf16.msra.mxu0 %v1699
    %2063 = vmatprep.subr.bf16.mxu0 %v1696
    %2064 = vmatpush1.bf16.msra.mxu0 %v1695
    %2065 = vmatprep.subr.bf16.mxu0 %v1692
    %2066 = vmatpush1.bf16.msra.mxu0 %v1691
    %2067 = vmatprep.subr.bf16.mxu0 %v1752
    %2068 = vmatpush2.bf16.msra.mxu0 %v1751
    %2069 = vmatprep.subr.bf16.mxu0 %v1748
    %2070 = vmatpush2.bf16.msra.mxu0 %v1747
    %2071 = vmatprep.subr.bf16.mxu0 %v1744
    %2072 = vmatpush2.bf16.msra.mxu0 %v1743
    %2073 = vmatprep.subr.bf16.mxu0 %v1740
    %2074 = vmatpush2.bf16.msra.mxu0 %v1739
    %2075 = vmatprep.subr.bf16.mxu0 %v1736
    %2076 = vmatpush2.bf16.msra.mxu0 %v1735
    %2077 = vmatprep.subr.bf16.mxu0 %v1732
    %2078 = vmatpush2.bf16.msra.mxu0 %v1731
    %2079 = vmatprep.subr.bf16.mxu0 %v1728
    %2080 = vmatpush2.bf16.msra.mxu0 %v1727
    %2081 = vmatprep.subr.bf16.mxu0 %v1724
    %2082 = vmatpush2.bf16.msra.mxu0 %v1723
    %2083 = vmatprep.mubr.bf16.mxu0 %v1148
    %2084 = vmatmul.mubr.bf16.gmra.mxu0 %v1147
    %v2085 = vpop.f32.mrf.mxu0
    %v2086 = vadd.f32 %v1296, %v2085
    %v2087 = vpop.f32.mrf.mxu0
    %v2088 = vadd.f32 %v1300, %v2087
    %v2089 = vpop.f32.mrf.mxu0
    %v2090 = vadd.f32 %v1296, %v2089
    %v2091 = vpop.f32.mrf.mxu0
    %v2092 = vadd.f32 %v1300, %v2091
    %2093 = vmatprep.mubr.bf16.mxu0 %v1152
    %2094 = vmatmul.mubr.bf16.gmra.mxu0 %v1151
    %v2095 = vpop.f32.mrf.mxu0
    %v2096 = vadd.f32 %v1296, %v2095
    %v2097 = vpop.f32.mrf.mxu0
    %v2098 = vadd.f32 %v1300, %v2097
    %v2099 = vpop.f32.mrf.mxu0
    %v2100 = vadd.f32 %v1296, %v2099
    %v2101 = vpop.f32.mrf.mxu0
    %v2102 = vadd.f32 %v1300, %v2101
    %2103 = vdwg.mxu0
    %2104 = vmatprep.subr.bf16.mxu0 %v1784
    %2105 = vmatpush1.bf16.msra.mxu0 %v1783
    %2106 = vmatprep.subr.bf16.mxu0 %v1780
    %2107 = vmatpush1.bf16.msra.mxu0 %v1779
    %2108 = vmatprep.subr.bf16.mxu0 %v1776
    %2109 = vmatpush1.bf16.msra.mxu0 %v1775
    %2110 = vmatprep.subr.bf16.mxu0 %v1772
    %2111 = vmatpush1.bf16.msra.mxu0 %v1771
    %2112 = vmatprep.subr.bf16.mxu0 %v1768
    %2113 = vmatpush1.bf16.msra.mxu0 %v1767
    %2114 = vmatprep.subr.bf16.mxu0 %v1764
    %2115 = vmatpush1.bf16.msra.mxu0 %v1763
    %2116 = vmatprep.subr.bf16.mxu0 %v1760
    %2117 = vmatpush1.bf16.msra.mxu0 %v1759
    %2118 = vmatprep.subr.bf16.mxu0 %v1756
    %2119 = vmatpush1.bf16.msra.mxu0 %v1755
    %2120 = vmatprep.subr.bf16.mxu0 %v1816
    %2121 = vmatpush2.bf16.msra.mxu0 %v1815
    %2122 = vmatprep.subr.bf16.mxu0 %v1812
    %2123 = vmatpush2.bf16.msra.mxu0 %v1811
    %2124 = vmatprep.subr.bf16.mxu0 %v1808
    %2125 = vmatpush2.bf16.msra.mxu0 %v1807
    %2126 = vmatprep.subr.bf16.mxu0 %v1804
    %2127 = vmatpush2.bf16.msra.mxu0 %v1803
    %2128 = vmatprep.subr.bf16.mxu0 %v1800
    %2129 = vmatpush2.bf16.msra.mxu0 %v1799
    %2130 = vmatprep.subr.bf16.mxu0 %v1796
    %2131 = vmatpush2.bf16.msra.mxu0 %v1795
    %2132 = vmatprep.subr.bf16.mxu0 %v1792
    %2133 = vmatpush2.bf16.msra.mxu0 %v1791
    %2134 = vmatprep.subr.bf16.mxu0 %v1788
    %2135 = vmatpush2.bf16.msra.mxu0 %v1787
    %2136 = vmatprep.mubr.bf16.mxu0 %v1150
    %2137 = vmatmul.mubr.bf16.gmra.mxu0 %v1149
    %v2138 = vpop.f32.mrf.mxu0
    %v2139 = vadd.f32 %v2086, %v2138
    %v2140 = vpop.f32.mrf.mxu0
    %v2141 = vadd.f32 %v2088, %v2140
    %v2142 = vpop.f32.mrf.mxu0
    %v2143 = vadd.f32 %v2090, %v2142
    %v2144 = vpop.f32.mrf.mxu0
    %v2145 = vadd.f32 %v2092, %v2144
    %2146 = vmatprep.mubr.bf16.mxu0 %v1154
    %2147 = vmatmul.mubr.bf16.gmra.mxu0 %v1153
    %v2148 = vpop.f32.mrf.mxu0
    %v2149 = vadd.f32 %v2096, %v2148
    %v2150 = vpop.f32.mrf.mxu0
    %v2151 = vadd.f32 %v2098, %v2150
    %v2152 = vpop.f32.mrf.mxu0
    %v2153 = vadd.f32 %v2100, %v2152
    %v2154 = vpop.f32.mrf.mxu0
    %v2155 = vadd.f32 %v2102, %v2154
    %2156 = vdwg.mxu0
    %v2157 = vmax.f32 %v2033, 0.0
    %v2158 = vmax.f32 %v2035, 0.0
    %v2159 = vmax.f32 %v2139, 0.0
    %v2160 = vmax.f32 %v2141, 0.0
    %v2161 = vmax.f32 %v2037, 0.0
    %v2162 = vmax.f32 %v2039, 0.0
    %v2163 = vmax.f32 %v2143, 0.0
    %v2164 = vmax.f32 %v2145, 0.0
    %v2165 = vmax.f32 %v2043, 0.0
    %v2166 = vmax.f32 %v2045, 0.0
    %v2167 = vmax.f32 %v2149, 0.0
    %v2168 = vmax.f32 %v2151, 0.0
    %v2169 = vmax.f32 %v2047, 0.0
    %v2170 = vmax.f32 %v2049, 0.0
    %v2171 = vmax.f32 %v2153, 0.0
    %v2172 = vmax.f32 %v2155, 0.0
    %v2173 = vpack.c.bf16 %v2161, %v2157
    %v2174 = vpack.c.bf16 %v2162, %v2158
    %v2175 = vpack.c.bf16 %v2163, %v2159
    %v2176 = vpack.c.bf16 %v2164, %v2160
    %v2177 = vpack.c.bf16 %v2169, %v2165
    %v2178 = vpack.c.bf16 %v2170, %v2166
    %v2179 = vpack.c.bf16 %v2171, %v2167
    %v2180 = vpack.c.bf16 %v2172, %v2168
    %v2181 = vld [vmem:[#allocation10] sm:$0xf]
    %v2182 = vld [vmem:[#allocation10 + $0x4] sm:$0xf]
    %v2183 = vld [vmem:[#allocation10 + $0x8] sm:$0xf]
    %v2184 = vld [vmem:[#allocation10 + $0xc] sm:$0xf]
    %v2185 = vld [vmem:[#allocation10 + $0x10] sm:$0xf]
    %v2186 = vld [vmem:[#allocation10 + $0x14] sm:$0xf]
    %v2187 = vld [vmem:[#allocation10 + $0x18] sm:$0xf]
    %v2188 = vld [vmem:[#allocation10 + $0x1c] sm:$0xf]
    %v2189 = vld [vmem:[#allocation10 + $0x20] sm:$0xf]
    %v2190 = vld [vmem:[#allocation10 + $0x24] sm:$0xf]
    %v2191 = vld [vmem:[#allocation10 + $0x28] sm:$0xf]
    %v2192 = vld [vmem:[#allocation10 + $0x2c] sm:$0xf]
    %v2193 = vld [vmem:[#allocation10 + $0x30] sm:$0xf]
    %v2194 = vld [vmem:[#allocation10 + $0x34] sm:$0xf]
    %v2195 = vld [vmem:[#allocation10 + $0x38] sm:$0xf]
    %v2196 = vld [vmem:[#allocation10 + $0x3c] sm:$0xf]
    %v2197 = vld [vmem:[#allocation10 + $0x40] sm:$0xf]
    %v2198 = vld [vmem:[#allocation10 + $0x44] sm:$0xf]
    %v2199 = vld [vmem:[#allocation10 + $0x48] sm:$0xf]
    %v2200 = vld [vmem:[#allocation10 + $0x4c] sm:$0xf]
    %v2201 = vld [vmem:[#allocation10 + $0x50] sm:$0xf]
    %v2202 = vld [vmem:[#allocation10 + $0x54] sm:$0xf]
    %v2203 = vld [vmem:[#allocation10 + $0x58] sm:$0xf]
    %v2204 = vld [vmem:[#allocation10 + $0x5c] sm:$0xf]
    %v2205 = vld [vmem:[#allocation10 + $0x60] sm:$0xf]
    %v2206 = vld [vmem:[#allocation10 + $0x64] sm:$0xf]
    %v2207 = vld [vmem:[#allocation10 + $0x68] sm:$0xf]
    %v2208 = vld [vmem:[#allocation10 + $0x6c] sm:$0xf]
    %v2209 = vld [vmem:[#allocation10 + $0x70] sm:$0xf]
    %v2210 = vld [vmem:[#allocation10 + $0x74] sm:$0xf]
    %v2211 = vld [vmem:[#allocation10 + $0x78] sm:$0xf]
    %v2212 = vld [vmem:[#allocation10 + $0x7c] sm:$0xf]
    %v2213 = vld [vmem:[#allocation10 + $0x80] sm:$0xf]
    %v2214 = vld [vmem:[#allocation10 + $0x84] sm:$0xf]
    %v2215 = vld [vmem:[#allocation10 + $0x88] sm:$0xf]
    %v2216 = vld [vmem:[#allocation10 + $0x8c] sm:$0xf]
    %v2217 = vld [vmem:[#allocation10 + $0x90] sm:$0xf]
    %v2218 = vld [vmem:[#allocation10 + $0x94] sm:$0xf]
    %v2219 = vld [vmem:[#allocation10 + $0x98] sm:$0xf]
    %v2220 = vld [vmem:[#allocation10 + $0x9c] sm:$0xf]
    %v2221 = vld [vmem:[#allocation10 + $0xa0] sm:$0xf]
    %v2222 = vld [vmem:[#allocation10 + $0xa4] sm:$0xf]
    %v2223 = vld [vmem:[#allocation10 + $0xa8] sm:$0xf]
    %v2224 = vld [vmem:[#allocation10 + $0xac] sm:$0xf]
    %v2225 = vld [vmem:[#allocation10 + $0xb0] sm:$0xf]
    %v2226 = vld [vmem:[#allocation10 + $0xb4] sm:$0xf]
    %v2227 = vld [vmem:[#allocation10 + $0xb8] sm:$0xf]
    %v2228 = vld [vmem:[#allocation10 + $0xbc] sm:$0xf]
    %v2229 = vld [vmem:[#allocation10 + $0xc0] sm:$0xf]
    %v2230 = vld [vmem:[#allocation10 + $0xc4] sm:$0xf]
    %v2231 = vld [vmem:[#allocation10 + $0xc8] sm:$0xf]
    %v2232 = vld [vmem:[#allocation10 + $0xcc] sm:$0xf]
    %v2233 = vld [vmem:[#allocation10 + $0xd0] sm:$0xf]
    %v2234 = vld [vmem:[#allocation10 + $0xd4] sm:$0xf]
    %v2235 = vld [vmem:[#allocation10 + $0xd8] sm:$0xf]
    %v2236 = vld [vmem:[#allocation10 + $0xdc] sm:$0xf]
    %v2237 = vld [vmem:[#allocation10 + $0xe0] sm:$0xf]
    %v2238 = vld [vmem:[#allocation10 + $0xe4] sm:$0xf]
    %v2239 = vld [vmem:[#allocation10 + $0xe8] sm:$0xf]
    %v2240 = vld [vmem:[#allocation10 + $0xec] sm:$0xf]
    %v2241 = vld [vmem:[#allocation10 + $0xf0] sm:$0xf]
    %v2242 = vld [vmem:[#allocation10 + $0xf4] sm:$0xf]
    %v2243 = vld [vmem:[#allocation10 + $0xf8] sm:$0xf]
    %v2244 = vld [vmem:[#allocation10 + $0xfc] sm:$0xf]
    %v2245 = vld [vmem:[%s6] sm:$0x1]
    %v2247 = vlaneseq
    %v2248 = vshrl.u32 %v2247, 7
    %v2249 = vsub.s32 0, %v2248
    %v2250 = vrot.slane %v2245, %v2249
    %v2316 = vunpack.c.l.b16 %v2181
    %v2317 = vunpack.c.l.b16 %v2182
    %v2318 = vunpack.c.l.b16 %v2183
    %v2319 = vunpack.c.l.b16 %v2184
    %v2320 = vunpack.c.l.b16 %v2185
    %v2321 = vunpack.c.l.b16 %v2186
    %v2322 = vunpack.c.l.b16 %v2187
    %v2323 = vunpack.c.l.b16 %v2188
    %v2324 = vunpack.c.l.b16 %v2189
    %v2325 = vunpack.c.l.b16 %v2190
    %v2326 = vunpack.c.l.b16 %v2191
    %v2327 = vunpack.c.l.b16 %v2192
    %v2328 = vunpack.c.l.b16 %v2193
    %v2329 = vunpack.c.l.b16 %v2194
    %v2330 = vunpack.c.l.b16 %v2195
    %v2331 = vunpack.c.l.b16 %v2196
    %v2332 = vunpack.c.l.b16 %v2197
    %v2333 = vunpack.c.l.b16 %v2198
    %v2334 = vunpack.c.l.b16 %v2199
    %v2335 = vunpack.c.l.b16 %v2200
    %v2336 = vunpack.c.l.b16 %v2201
    %v2337 = vunpack.c.l.b16 %v2202
    %v2338 = vunpack.c.l.b16 %v2203
    %v2339 = vunpack.c.l.b16 %v2204
    %v2340 = vunpack.c.l.b16 %v2205
    %v2341 = vunpack.c.l.b16 %v2206
    %v2342 = vunpack.c.l.b16 %v2207
    %v2343 = vunpack.c.l.b16 %v2208
    %v2344 = vunpack.c.l.b16 %v2209
    %v2345 = vunpack.c.l.b16 %v2210
    %v2346 = vunpack.c.l.b16 %v2211
    %v2347 = vunpack.c.l.b16 %v2212
    %v2348 = vunpack.c.l.b16 %v2213
    %v2349 = vunpack.c.l.b16 %v2214
    %v2350 = vunpack.c.l.b16 %v2215
    %v2351 = vunpack.c.l.b16 %v2216
    %v2352 = vunpack.c.l.b16 %v2217
    %v2353 = vunpack.c.l.b16 %v2218
    %v2354 = vunpack.c.l.b16 %v2219
    %v2355 = vunpack.c.l.b16 %v2220
    %v2356 = vunpack.c.l.b16 %v2221
    %v2357 = vunpack.c.l.b16 %v2222
    %v2358 = vunpack.c.l.b16 %v2223
    %v2359 = vunpack.c.l.b16 %v2224
    %v2360 = vunpack.c.l.b16 %v2225
    %v2361 = vunpack.c.l.b16 %v2226
    %v2362 = vunpack.c.l.b16 %v2227
    %v2363 = vunpack.c.l.b16 %v2228
    %v2364 = vunpack.c.l.b16 %v2229
    %v2365 = vunpack.c.l.b16 %v2230
    %v2366 = vunpack.c.l.b16 %v2231
    %v2367 = vunpack.c.l.b16 %v2232
    %v2368 = vunpack.c.l.b16 %v2233
    %v2369 = vunpack.c.l.b16 %v2234
    %v2370 = vunpack.c.l.b16 %v2235
    %v2371 = vunpack.c.l.b16 %v2236
    %v2372 = vunpack.c.l.b16 %v2237
    %v2373 = vunpack.c.l.b16 %v2238
    %v2374 = vunpack.c.l.b16 %v2239
    %v2375 = vunpack.c.l.b16 %v2240
    %v2376 = vunpack.c.l.b16 %v2241
    %v2377 = vunpack.c.l.b16 %v2242
    %v2378 = vunpack.c.l.b16 %v2243
    %v2379 = vunpack.c.l.b16 %v2244
    %v2380 = vpack.c.b16 %v2317, %v2316
    %v2381 = vpack.c.b16 %v2319, %v2318
    %v2382 = vpack.c.b16 %v2321, %v2320
    %v2383 = vpack.c.b16 %v2323, %v2322
    %v2384 = vpack.c.b16 %v2325, %v2324
    %v2385 = vpack.c.b16 %v2327, %v2326
    %v2386 = vpack.c.b16 %v2329, %v2328
    %v2387 = vpack.c.b16 %v2331, %v2330
    %v2388 = vpack.c.b16 %v2333, %v2332
    %v2389 = vpack.c.b16 %v2335, %v2334
    %v2390 = vpack.c.b16 %v2337, %v2336
    %v2391 = vpack.c.b16 %v2339, %v2338
    %v2392 = vpack.c.b16 %v2341, %v2340
    %v2393 = vpack.c.b16 %v2343, %v2342
    %v2394 = vpack.c.b16 %v2345, %v2344
    %v2395 = vpack.c.b16 %v2347, %v2346
    %v2396 = vpack.c.b16 %v2349, %v2348
    %v2397 = vpack.c.b16 %v2351, %v2350
    %v2398 = vpack.c.b16 %v2353, %v2352
    %v2399 = vpack.c.b16 %v2355, %v2354
    %v2400 = vpack.c.b16 %v2357, %v2356
    %v2401 = vpack.c.b16 %v2359, %v2358
    %v2402 = vpack.c.b16 %v2361, %v2360
    %v2403 = vpack.c.b16 %v2363, %v2362
    %v2404 = vpack.c.b16 %v2365, %v2364
    %v2405 = vpack.c.b16 %v2367, %v2366
    %v2406 = vpack.c.b16 %v2369, %v2368
    %v2407 = vpack.c.b16 %v2371, %v2370
    %v2408 = vpack.c.b16 %v2373, %v2372
    %v2409 = vpack.c.b16 %v2375, %v2374
    %v2410 = vpack.c.b16 %v2377, %v2376
    %v2411 = vpack.c.b16 %v2379, %v2378
    %2444 = vmatprep.subr.bf16.mxu0 0
    %2445 = vmatpush1.bf16.msra.mxu0 %v2387
    %2446 = vmatprep.subr.bf16.mxu0 0
    %2447 = vmatpush1.bf16.msra.mxu0 %v2386
    %2448 = vmatprep.subr.bf16.mxu0 0
    %2449 = vmatpush1.bf16.msra.mxu0 %v2385
    %2450 = vmatprep.subr.bf16.mxu0 0
    %2451 = vmatpush1.bf16.msra.mxu0 %v2384
    %2452 = vmatprep.subr.bf16.mxu0 0
    %2453 = vmatpush1.bf16.msra.mxu0 %v2383
    %2454 = vmatprep.subr.bf16.mxu0 0
    %2455 = vmatpush1.bf16.msra.mxu0 %v2382
    %2456 = vmatprep.subr.bf16.mxu0 0
    %2457 = vmatpush1.bf16.msra.mxu0 %v2381
    %2458 = vmatprep.subr.bf16.mxu0 0
    %2459 = vmatpush1.bf16.msra.mxu0 %v2380
    %2460 = vmatprep.subr.bf16.mxu0 0
    %2461 = vmatpush2.bf16.msra.mxu0 %v2395
    %2462 = vmatprep.subr.bf16.mxu0 0
    %2463 = vmatpush2.bf16.msra.mxu0 %v2394
    %2464 = vmatprep.subr.bf16.mxu0 0
    %2465 = vmatpush2.bf16.msra.mxu0 %v2393
    %2466 = vmatprep.subr.bf16.mxu0 0
    %2467 = vmatpush2.bf16.msra.mxu0 %v2392
    %2468 = vmatprep.subr.bf16.mxu0 0
    %2469 = vmatpush2.bf16.msra.mxu0 %v2391
    %2470 = vmatprep.subr.bf16.mxu0 0
    %2471 = vmatpush2.bf16.msra.mxu0 %v2390
    %2472 = vmatprep.subr.bf16.mxu0 0
    %2473 = vmatpush2.bf16.msra.mxu0 %v2389
    %2474 = vmatprep.subr.bf16.mxu0 0
    %2475 = vmatpush2.bf16.msra.mxu0 %v2388
    %2476 = vmatprep.mubr.bf16.mxu0 %v2174
    %2477 = vmatmul.mubr.bf16.gmra.mxu0 %v2173
    %v2478 = vpop.f32.mrf.mxu0
    %v2479 = vadd.f32 %v2250, %v2478
    %v2480 = vpop.f32.mrf.mxu0
    %v2481 = vpop.f32.mrf.mxu0
    %v2482 = vadd.f32 %v2250, %v2481
    %v2483 = vpop.f32.mrf.mxu0
    %2484 = vmatprep.mubr.bf16.mxu0 %v2178
    %2485 = vmatmul.mubr.bf16.gmra.mxu0 %v2177
    %v2486 = vpop.f32.mrf.mxu0
    %v2487 = vadd.f32 %v2250, %v2486
    %v2488 = vpop.f32.mrf.mxu0
    %v2489 = vpop.f32.mrf.mxu0
    %v2490 = vadd.f32 %v2250, %v2489
    %v2491 = vpop.f32.mrf.mxu0
    %2492 = vdwg.mxu0
    %2493 = vmatprep.subr.bf16.mxu0 0
    %2494 = vmatpush1.bf16.msra.mxu0 %v2403
    %2495 = vmatprep.subr.bf16.mxu0 0
    %2496 = vmatpush1.bf16.msra.mxu0 %v2402
    %2497 = vmatprep.subr.bf16.mxu0 0
    %2498 = vmatpush1.bf16.msra.mxu0 %v2401
    %2499 = vmatprep.subr.bf16.mxu0 0
    %2500 = vmatpush1.bf16.msra.mxu0 %v2400
    %2501 = vmatprep.subr.bf16.mxu0 0
    %2502 = vmatpush1.bf16.msra.mxu0 %v2399
    %2503 = vmatprep.subr.bf16.mxu0 0
    %2504 = vmatpush1.bf16.msra.mxu0 %v2398
    %2505 = vmatprep.subr.bf16.mxu0 0
    %2506 = vmatpush1.bf16.msra.mxu0 %v2397
    %2507 = vmatprep.subr.bf16.mxu0 0
    %2508 = vmatpush1.bf16.msra.mxu0 %v2396
    %2509 = vmatprep.subr.bf16.mxu0 0
    %2510 = vmatpush2.bf16.msra.mxu0 %v2411
    %2511 = vmatprep.subr.bf16.mxu0 0
    %2512 = vmatpush2.bf16.msra.mxu0 %v2410
    %2513 = vmatprep.subr.bf16.mxu0 0
    %2514 = vmatpush2.bf16.msra.mxu0 %v2409
    %2515 = vmatprep.subr.bf16.mxu0 0
    %2516 = vmatpush2.bf16.msra.mxu0 %v2408
    %2517 = vmatprep.subr.bf16.mxu0 0
    %2518 = vmatpush2.bf16.msra.mxu0 %v2407
    %2519 = vmatprep.subr.bf16.mxu0 0
    %2520 = vmatpush2.bf16.msra.mxu0 %v2406
    %2521 = vmatprep.subr.bf16.mxu0 0
    %2522 = vmatpush2.bf16.msra.mxu0 %v2405
    %2523 = vmatprep.subr.bf16.mxu0 0
    %2524 = vmatpush2.bf16.msra.mxu0 %v2404
    %2525 = vmatprep.mubr.bf16.mxu0 %v2176
    %2526 = vmatmul.mubr.bf16.gmra.mxu0 %v2175
    %v2527 = vpop.f32.mrf.mxu0
    %v2528 = vadd.f32 %v2479, %v2527
    %v2529 = vpop.f32.mrf.mxu0
    %v2530 = vpop.f32.mrf.mxu0
    %v2531 = vadd.f32 %v2482, %v2530
    %v2532 = vpop.f32.mrf.mxu0
    %2533 = vmatprep.mubr.bf16.mxu0 %v2180
    %2534 = vmatmul.mubr.bf16.gmra.mxu0 %v2179
    %v2535 = vpop.f32.mrf.mxu0
    %v2536 = vadd.f32 %v2487, %v2535
    %v2537 = vpop.f32.mrf.mxu0
    %v2538 = vpop.f32.mrf.mxu0
    %v2539 = vadd.f32 %v2490, %v2538
    %v2540 = vpop.f32.mrf.mxu0
    %2541 = vdwg.mxu0
    %2542 = vst [vmem:[%s7] sm:$0xff] %v2528
    %2543 = vst [vmem:[%s7 + $0x8] sm:$0xff] %v2531
    %2544 = vst [vmem:[%s7 + $0x10] sm:$0xff] %v2536
    %2545 = vst [vmem:[%s7 + $0x18] sm:$0xff] %v2539
    // Predicated region
    $region54: #{label_predictor_forward.1} parent=1 // pred_check
      _
    $region55: #{label_predictor_forward.1} parent=1 // pred_check_branch
      %2547 = sbr.rel (0) target = $region57
    $region56: #{label_predictor_forward.1} parent=1 // pred_region
      _
    $region57: #{label_predictor_forward.1} parent=1 // pred_fallthru
      _
    // Predicated region
    $region58: #{label_predictor_forward.1} parent=1 // pred_check
      _
    $region59: #{label_predictor_forward.1} parent=1 // pred_check_branch
      %2549 = sbr.rel (0) target = $region61
    $region60: #{label_predictor_forward.1} parent=1 // pred_region
      _
    $region61: #{label_predictor_forward.1} parent=1 // pred_fallthru
      _
    %2550 = vsyncpa [#allocation3], 1
    %2551 = vsyncpa [#allocation5], 1
    %2552 = vsyncpa [#allocation8], 1
    %2553 = vsyncpa [#allocation11], 1

</llo_original>
